<compile_context>
chip_gen: v7x
topology: tpu7x:2x2x1
jax: 0.10.0
libtpu: 0.0.40
codegen_flags: <defaults>
</compile_context>

<pallas_src>
import functools

import jax
import jax.numpy as jnp
from jax import lax
from jax.experimental import pallas as pl
from jax.experimental.pallas import tpu as pltpu


def _round_up(x, m):
    return (x + m - 1) // m * m


# ---------------------------------------------------------------------------
# Fused head kernel: fc6+ReLU -> QKV attention (+residual) -> fc7+ReLU
#                    -> fused [cls|box] predictor with YouTube_Objects masking
#                    -> class_prob softmax (demo path)
# ---------------------------------------------------------------------------
def _fused_head_kernel(
    flat_ref,      # [N, IN_DIM]
    fc6_w_ref,     # [IN_DIM, REP]
    fc6_b_ref,     # [1, REP]
    wqkv_ref,      # [REP, 3*REP]   (Wq | Wk | Wv fused)
    fc7_w_ref,     # [REP, REP]
    fc7_b_ref,     # [1, REP]
    pred_w_ref,    # [REP, PRED_PAD]  (cls_w | box_w, zero-padded, lane-dense)
    pred_b_ref,    # [1, PRED_PAD]
    mask_ref,      # [1, PRED_PAD]    (1.0 on masked class columns)
    x_ref,         # out: [N, REP]       enhanced ROI features
    pred_ref,      # out: [N, PRED_PAD]  masked logits | box regression (padded)
    prob_ref,      # out: [N, PRED_PAD]  softmax over class columns (padded)
    *,
    rep_size,
    num_classes,
    scale,
):
    flat = flat_ref[...]

    # ---- fc6 + ReLU ----
    h = jnp.dot(flat, fc6_w_ref[...], preferred_element_type=jnp.float32)
    h = jnp.maximum(h + fc6_b_ref[...], 0.0)

    # ---- single-head self-attention over ROIs, with residual ----
    qkv = jnp.dot(h, wqkv_ref[...], preferred_element_type=jnp.float32)
    q = qkv[:, :rep_size]
    k = qkv[:, rep_size:2 * rep_size]
    v = qkv[:, 2 * rep_size:3 * rep_size]
    # contract last dims of q and k directly on the MXU (no explicit transpose)
    s = lax.dot_general(
        q, k, (((1,), (1,)), ((), ())), preferred_element_type=jnp.float32
    ) * scale
    s = s - jnp.max(s, axis=-1, keepdims=True)
    p = jnp.exp(s)
    p = p * pl.reciprocal(jnp.sum(p, axis=-1, keepdims=True), approx=True)
    h = h + jnp.dot(p, v, preferred_element_type=jnp.float32)

    # ---- fc7 + ReLU ----
    x = jnp.dot(h, fc7_w_ref[...], preferred_element_type=jnp.float32)
    x = jnp.maximum(x + fc7_b_ref[...], 0.0)
    x_ref[...] = x.astype(x_ref.dtype)

    # ---- fused predictor: [cls_score | bbox_pred], lane-dense padded ----
    pred = jnp.dot(x, pred_w_ref[...], preferred_element_type=jnp.float32)
    pred = pred + pred_b_ref[...]
    # class_logits[:, no_yot] = -99.0  (mask is nonzero only on class columns)
    pred = jnp.where(mask_ref[...] > 0.5, jnp.float32(-99.0), pred)
    pred_ref[...] = pred.astype(pred_ref.dtype)

    # ---- demo path: class_prob = softmax(class_logits, -1) ----
    # Neutralize padding + box-regression columns with -inf so they drop out
    # of the softmax; the -99.0 masked classes stay in (exp(-99) ~ 0), which
    # matches torch.softmax over the masked class_logits exactly.
    col = lax.broadcasted_iota(jnp.int32, pred.shape, 1)
    cls_only = jnp.where(col < num_classes, pred, -jnp.inf)
    cls_max = jnp.max(cls_only, axis=-1, keepdims=True)
    e = jnp.exp(cls_only - cls_max)
    prob = e * pl.reciprocal(jnp.sum(e, axis=-1, keepdims=True), approx=True)
    prob_ref[...] = prob.astype(prob_ref.dtype)


def fused_roi_head(flat, fc6_w, fc6_b, wqkv, fc7_w, fc7_b, pred_w, pred_b,
                   mask_pad, *, num_classes):
    n, in_dim = flat.shape
    rep = fc6_w.shape[1]
    pred_pad = pred_w.shape[1]

    kernel = functools.partial(
        _fused_head_kernel,
        rep_size=rep,
        num_classes=num_classes,
        scale=1.0 / float(rep) ** 0.5,
    )

    flops = 2 * n * (
        in_dim * rep          # fc6
        + rep * 3 * rep       # qkv projection
        + n * rep             # scores
        + n * rep             # attn * V
        + rep * rep           # fc7
        + rep * pred_pad      # predictor
    )
    bytes_accessed = 4 * (
        n * in_dim + in_dim * rep + rep + rep * 3 * rep + rep * rep + rep
        + rep * pred_pad + pred_pad + pred_pad
        + n * rep + 2 * n * pred_pad
    )
    cost = pl.CostEstimate(
        flops=flops,
        transcendentals=n * n + n * pred_pad,
        bytes_accessed=bytes_accessed,
    )

    return pl.pallas_call(
        kernel,
        out_shape=(
            jax.ShapeDtypeStruct((n, rep), flat.dtype),
            jax.ShapeDtypeStruct((n, pred_pad), flat.dtype),
            jax.ShapeDtypeStruct((n, pred_pad), flat.dtype),
        ),
        grid_spec=pltpu.PrefetchScalarGridSpec(
            num_scalar_prefetch=0,
            grid=(1,),
            in_specs=[
                pl.BlockSpec((n, in_dim), lambda i: (0, 0)),
                pl.BlockSpec((in_dim, rep), lambda i: (0, 0)),
                pl.BlockSpec((1, rep), lambda i: (0, 0)),
                pl.BlockSpec((rep, 3 * rep), lambda i: (0, 0)),
                pl.BlockSpec((rep, rep), lambda i: (0, 0)),
                pl.BlockSpec((1, rep), lambda i: (0, 0)),
                pl.BlockSpec((rep, pred_pad), lambda i: (0, 0)),
                pl.BlockSpec((1, pred_pad), lambda i: (0, 0)),
                pl.BlockSpec((1, pred_pad), lambda i: (0, 0)),
            ],
            out_specs=[
                pl.BlockSpec((n, rep), lambda i: (0, 0)),
                pl.BlockSpec((n, pred_pad), lambda i: (0, 0)),
                pl.BlockSpec((n, pred_pad), lambda i: (0, 0)),
            ],
        ),
        compiler_params=pltpu.CompilerParams(dimension_semantics=("arbitrary",)),
        cost_estimate=cost,
    )(flat, fc6_w, fc6_b, wqkv, fc7_w, fc7_b, pred_w, pred_b, mask_pad)


# ---------------------------------------------------------------------------
# Parameter construction & one-time fused-weight preparation
# ---------------------------------------------------------------------------
def make_params(key, in_dim, rep_size, num_classes):
    ks = jax.random.split(key, 8)
    p = {}
    p["fc6_w"] = jax.random.normal(ks[0], (in_dim, rep_size), jnp.float32) / jnp.sqrt(in_dim)
    p["fc6_b"] = jnp.zeros((rep_size,), jnp.float32)
    p["fc7_w"] = jax.random.normal(ks[1], (rep_size, rep_size), jnp.float32) / jnp.sqrt(rep_size)
    p["fc7_b"] = jnp.zeros((rep_size,), jnp.float32)
    p["att_wq"] = jax.random.normal(ks[2], (rep_size, rep_size), jnp.float32) / jnp.sqrt(rep_size)
    p["att_wk"] = jax.random.normal(ks[3], (rep_size, rep_size), jnp.float32) / jnp.sqrt(rep_size)
    p["att_wv"] = jax.random.normal(ks[4], (rep_size, rep_size), jnp.float32) / jnp.sqrt(rep_size)
    p["cls_w"] = 0.01 * jax.random.normal(ks[5], (rep_size, num_classes), jnp.float32)
    p["cls_b"] = jnp.zeros((num_classes,), jnp.float32)
    p["box_w"] = 0.001 * jax.random.normal(ks[6], (rep_size, num_classes * 4), jnp.float32)
    p["box_b"] = jnp.zeros((num_classes * 4,), jnp.float32)
    return p


def prepare_fused_params(params, cls_mask, num_classes):
    """One-time weight fusion/padding (done ONCE, outside the per-call jit)."""
    rep = params["fc6_w"].shape[1]
    box_dim = 4 * num_classes
    pred_dim = num_classes + box_dim
    pred_pad = _round_up(pred_dim, 128)        # lane-dense padded output width

    wqkv = jnp.concatenate(
        [params["att_wq"], params["att_wk"], params["att_wv"]], axis=1)

    pred_w = jnp.zeros((rep, pred_pad), jnp.float32)
    pred_w = pred_w.at[:, :num_classes].set(params["cls_w"])
    pred_w = pred_w.at[:, num_classes:pred_dim].set(params["box_w"])
    pred_b = jnp.zeros((pred_pad,), jnp.float32)
    pred_b = pred_b.at[:num_classes].set(params["cls_b"])
    pred_b = pred_b.at[num_classes:pred_dim].set(params["box_b"])
    mask_pad = jnp.zeros((pred_pad,), jnp.float32).at[:num_classes].set(cls_mask)

    fused = {
        "fc6_w": params["fc6_w"],
        "fc6_b": params["fc6_b"].reshape(1, rep),
        "wqkv": wqkv,
        "fc7_w": params["fc7_w"],
        "fc7_b": params["fc7_b"].reshape(1, rep),
        "pred_w": pred_w,
        "pred_b": pred_b.reshape(1, pred_pad),
        "mask_pad": mask_pad.reshape(1, pred_pad),
    }
    return jax.tree_util.tree_map(jnp.asarray, fused)


# ---------------------------------------------------------------------------
# ROIAttentionBoxHead forward (inference path)
# ---------------------------------------------------------------------------
@functools.partial(jax.jit, static_argnames=("num_classes",))
def roi_attention_box_head_forward(pooled_rois, proposals, fused_params, *, num_classes):
    """
    pooled_rois: [N_roi, C, P, P]  (NCHW; what ROIAlign would have produced)
    proposals:   [N_roi, 4]        (carried through; ROIAlign/NMS are TODO(synk))
    Returns (x, class_logits, box_regression, class_prob) — the tensors the
    PyTorch forward produces on the inference path (post_processor is a TODO).
    """
    n = pooled_rois.shape[0]
    flat = pooled_rois.reshape(n, -1)          # PyTorch .view(N, -1) order (C,H,W)

    x, pred, prob = fused_roi_head(
        flat,
        fused_params["fc6_w"], fused_params["fc6_b"],
        fused_params["wqkv"],
        fused_params["fc7_w"], fused_params["fc7_b"],
        fused_params["pred_w"], fused_params["pred_b"], fused_params["mask_pad"],
        num_classes=num_classes,
    )

    pred_dim = num_classes + 4 * num_classes
    class_logits = pred[:, :num_classes]
    box_regression = pred[:, num_classes:pred_dim]
    class_prob = prob[:, :num_classes]         # demo path: softmax(class_logits)
    return x, class_logits, box_regression, class_prob


if __name__ == "__main__":
    key = jax.random.PRNGKey(0)
    k_feat, k_prop, k_par = jax.random.split(key, 3)

    N_ROI, C, P = 16, 16, 8          # 16 ROIs, 16 channels, 8x8 pooled resolution
    REP_SIZE = 128                   # MLP representation size
    NUM_CLASSES = 31                 # YouTube_Objects class count (matches the mask logic)
    IN_DIM = C * P * P

    pooled_rois = jax.random.normal(k_feat, (N_ROI, C, P, P), jnp.float32)
    proposals = jax.random.uniform(k_prop, (N_ROI, 4), jnp.float32) * 64.0

    # not self.training and 'YouTube_Objects' in datasets_test:
    keep = {0, 1, 5, 28, 7, 10, 8, 9, 15, 19, 26}
    no_yot = sorted(set(range(NUM_CLASSES)) - keep)
    cls_mask = jnp.zeros((NUM_CLASSES,), jnp.float32).at[jnp.array(no_yot)].set(1.0)

    params = make_params(k_par, IN_DIM, REP_SIZE, NUM_CLASSES)
    fused_params = prepare_fused_params(params, cls_mask, NUM_CLASSES)
    jax.block_until_ready(fused_params)

    x, class_logits, box_regression, class_prob = roi_attention_box_head_forward(
        pooled_rois, proposals, fused_params, num_classes=NUM_CLASSES
    )
    jax.block_until_ready((x, class_logits, box_regression, class_prob))

    # light semantic checks
    assert x.shape == (N_ROI, REP_SIZE)
    assert class_logits.shape == (N_ROI, NUM_CLASSES)
    assert box_regression.shape == (N_ROI, NUM_CLASSES * 4)
    assert class_prob.shape == (N_ROI, NUM_CLASSES)
    masked_cols = class_logits[:, jnp.array(no_yot)]
    assert bool(jnp.all(masked_cols == -99.0)), "YouTube_Objects masking failed"
    kept_cols = class_logits[:, jnp.array(sorted(keep))]
    assert bool(jnp.all(kept_cols != -99.0)), "kept classes were wrongly masked"
    assert bool(jnp.all(jnp.isfinite(box_regression)))
    assert bool(jnp.all(jnp.isfinite(x)))
    row_sums = jnp.sum(class_prob, axis=-1)
    assert bool(jnp.all(jnp.abs(row_sums - 1.0) < 1e-2)), "class_prob rows must sum to 1"
    ref_prob = jax.nn.softmax(class_logits, axis=-1)
    assert bool(jnp.all(jnp.abs(class_prob - ref_prob) < 1e-3)), "in-kernel softmax mismatch"

    print("KERNEL_OK")
</pallas_src>

<mosaic_0001>
module attributes {stable_mosaic.version = 11 : i64} {
  func.func @_fused_head_kernel(%arg0: i32, %arg1: memref<16x1024xf32, #tpu.memory_space<vmem>>, %arg2: memref<1024x128xf32, #tpu.memory_space<vmem>>, %arg3: memref<1x128xf32, #tpu.memory_space<vmem>>, %arg4: memref<128x384xf32, #tpu.memory_space<vmem>>, %arg5: memref<128x128xf32, #tpu.memory_space<vmem>>, %arg6: memref<1x128xf32, #tpu.memory_space<vmem>>, %arg7: memref<128x256xf32, #tpu.memory_space<vmem>>, %arg8: memref<1x256xf32, #tpu.memory_space<vmem>>, %arg9: memref<1x256xf32, #tpu.memory_space<vmem>>, %arg10: memref<16x128xf32, #tpu.memory_space<vmem>>, %arg11: memref<16x256xf32, #tpu.memory_space<vmem>>, %arg12: memref<16x256xf32, #tpu.memory_space<vmem>>) attributes {dimension_semantics = [#tpu.dimension_semantics<arbitrary>], iteration_bounds = array<i64: 1>, scalar_prefetch = 0 : i64, scratch_operands = 0 : i64, tpu.core_type = #tpu.core_type<tc>, window_params = [{pipeline_mode = #tpu.pipeline_mode<synchronous>, transform_indices = @transform_0, window_bounds = array<i64: 16, 1024>}, {pipeline_mode = #tpu.pipeline_mode<synchronous>, transform_indices = @transform_1, window_bounds = array<i64: 1024, 128>}, {pipeline_mode = #tpu.pipeline_mode<synchronous>, transform_indices = @transform_2, window_bounds = array<i64: 1, 128>}, {pipeline_mode = #tpu.pipeline_mode<synchronous>, transform_indices = @transform_3, window_bounds = array<i64: 128, 384>}, {pipeline_mode = #tpu.pipeline_mode<synchronous>, transform_indices = @transform_4, window_bounds = array<i64: 128, 128>}, {pipeline_mode = #tpu.pipeline_mode<synchronous>, transform_indices = @transform_5, window_bounds = array<i64: 1, 128>}, {pipeline_mode = #tpu.pipeline_mode<synchronous>, transform_indices = @transform_6, window_bounds = array<i64: 128, 256>}, {pipeline_mode = #tpu.pipeline_mode<synchronous>, transform_indices = @transform_7, window_bounds = array<i64: 1, 256>}, {pipeline_mode = #tpu.pipeline_mode<synchronous>, transform_indices = @transform_8, window_bounds = array<i64: 1, 256>}, {pipeline_mode = #tpu.pipeline_mode<synchronous>, transform_indices = @transform_9, window_bounds = array<i64: 16, 128>}, {pipeline_mode = #tpu.pipeline_mode<synchronous>, transform_indices = @transform_10, window_bounds = array<i64: 16, 256>}, {pipeline_mode = #tpu.pipeline_mode<synchronous>, transform_indices = @transform_11, window_bounds = array<i64: 16, 256>}]} {
    %c0 = arith.constant 0 : index
    %c0_0 = arith.constant 0 : index
    %0 = vector.load %arg1[%c0, %c0_0] : memref<16x1024xf32, #tpu.memory_space<vmem>>, vector<16x1024xf32>
    %c0_1 = arith.constant 0 : index
    %c0_2 = arith.constant 0 : index
    %1 = vector.load %arg2[%c0_1, %c0_2] : memref<1024x128xf32, #tpu.memory_space<vmem>>, vector<1024x128xf32>
    %cst = arith.constant dense<0.000000e+00> : vector<16x128xf32>
    %2 = tpu.matmul %0, %1, %cst {dimension_numbers = #tpu.dot_dimension_numbers<[1], [0], [0], [1], [0, 0, 1, 1], [], []>} : vector<16x1024xf32>, vector<1024x128xf32>, vector<16x128xf32> -> vector<16x128xf32>
    %c0_3 = arith.constant 0 : index
    %c0_4 = arith.constant 0 : index
    %3 = vector.load %arg3[%c0_3, %c0_4] : memref<1x128xf32, #tpu.memory_space<vmem>>, vector<1x128xf32>
    %4 = vector.broadcast %3 : vector<1x128xf32> to vector<16x128xf32>
    %5 = arith.addf %2, %4 : vector<16x128xf32>
    %cst_5 = arith.constant 0.000000e+00 : f32
    %6 = vector.broadcast %cst_5 : f32 to vector<16x128xf32>
    %7 = arith.maximumf %5, %6 : vector<16x128xf32>
    %c0_6 = arith.constant 0 : index
    %c0_7 = arith.constant 0 : index
    %8 = vector.load %arg4[%c0_6, %c0_7] : memref<128x384xf32, #tpu.memory_space<vmem>>, vector<128x384xf32>
    %cst_8 = arith.constant dense<0.000000e+00> : vector<16x384xf32>
    %9 = tpu.matmul %7, %8, %cst_8 {dimension_numbers = #tpu.dot_dimension_numbers<[1], [0], [0], [1], [0, 0, 1, 1], [], []>} : vector<16x128xf32>, vector<128x384xf32>, vector<16x384xf32> -> vector<16x384xf32>
    %10 = vector.extract_strided_slice %9 {offsets = [0, 0], sizes = [16, 128], strides = [1, 1]} : vector<16x384xf32> to vector<16x128xf32>
    %11 = vector.extract_strided_slice %9 {offsets = [0, 128], sizes = [16, 128], strides = [1, 1]} : vector<16x384xf32> to vector<16x128xf32>
    %12 = vector.extract_strided_slice %9 {offsets = [0, 256], sizes = [16, 128], strides = [1, 1]} : vector<16x384xf32> to vector<16x128xf32>
    %cst_9 = arith.constant dense<0.000000e+00> : vector<16x16xf32>
    %13 = tpu.matmul %10, %11, %cst_9 {dimension_numbers = #tpu.dot_dimension_numbers<[1], [1], [0], [0], [0, 0, 1, 0], [], []>} : vector<16x128xf32>, vector<16x128xf32>, vector<16x16xf32> -> vector<16x16xf32>
    %cst_10 = arith.constant 0.0883883461 : f32
    %14 = vector.broadcast %cst_10 : f32 to vector<16x16xf32>
    %15 = arith.mulf %13, %14 : vector<16x16xf32>
    %cst_11 = arith.constant dense<0xFF800000> : vector<16xf32>
    %16 = vector.multi_reduction <maximumf>, %15, %cst_11 [1] : vector<16x16xf32> to vector<16xf32>
    %17 = vector.shape_cast %16 : vector<16xf32> to vector<16x1xf32>
    %18 = vector.broadcast %17 : vector<16x1xf32> to vector<16x16xf32>
    %19 = arith.subf %15, %18 : vector<16x16xf32>
    %20 = math.exp %19 : vector<16x16xf32>
    %cst_12 = arith.constant dense<0.000000e+00> : vector<16xf32>
    %21 = vector.multi_reduction <add>, %20, %cst_12 [1] : vector<16x16xf32> to vector<16xf32>
    %22 = vector.shape_cast %21 : vector<16xf32> to vector<16x1xf32>
    %23 = tpu.reciprocal %22 {approx = true} : vector<16x1xf32> -> vector<16x1xf32>
    %24 = vector.broadcast %23 : vector<16x1xf32> to vector<16x16xf32>
    %25 = arith.mulf %20, %24 : vector<16x16xf32>
    %cst_13 = arith.constant dense<0.000000e+00> : vector<16x128xf32>
    %26 = tpu.matmul %25, %12, %cst_13 {dimension_numbers = #tpu.dot_dimension_numbers<[1], [0], [0], [1], [0, 0, 1, 1], [], []>} : vector<16x16xf32>, vector<16x128xf32>, vector<16x128xf32> -> vector<16x128xf32>
    %27 = arith.addf %7, %26 : vector<16x128xf32>
    %c0_14 = arith.constant 0 : index
    %c0_15 = arith.constant 0 : index
    %28 = vector.load %arg5[%c0_14, %c0_15] : memref<128x128xf32, #tpu.memory_space<vmem>>, vector<128x128xf32>
    %cst_16 = arith.constant dense<0.000000e+00> : vector<16x128xf32>
    %29 = tpu.matmul %27, %28, %cst_16 {dimension_numbers = #tpu.dot_dimension_numbers<[1], [0], [0], [1], [0, 0, 1, 1], [], []>} : vector<16x128xf32>, vector<128x128xf32>, vector<16x128xf32> -> vector<16x128xf32>
    %c0_17 = arith.constant 0 : index
    %c0_18 = arith.constant 0 : index
    %30 = vector.load %arg6[%c0_17, %c0_18] : memref<1x128xf32, #tpu.memory_space<vmem>>, vector<1x128xf32>
    %31 = vector.broadcast %30 : vector<1x128xf32> to vector<16x128xf32>
    %32 = arith.addf %29, %31 : vector<16x128xf32>
    %cst_19 = arith.constant 0.000000e+00 : f32
    %33 = vector.broadcast %cst_19 : f32 to vector<16x128xf32>
    %34 = arith.maximumf %32, %33 : vector<16x128xf32>
    %c0_20 = arith.constant 0 : index
    %c0_21 = arith.constant 0 : index
    %35 = vector.load %arg10[%c0_20, %c0_21] : memref<16x128xf32, #tpu.memory_space<vmem>>, vector<16x128xf32>
    tpu.vector_store %arg10[%c0_20, %c0_21], %34 {strides = array<i32>} : memref<16x128xf32, #tpu.memory_space<vmem>>, vector<16x128xf32>,
    %c0_22 = arith.constant 0 : index
    %c0_23 = arith.constant 0 : index
    %36 = vector.load %arg7[%c0_22, %c0_23] : memref<128x256xf32, #tpu.memory_space<vmem>>, vector<128x256xf32>
    %cst_24 = arith.constant dense<0.000000e+00> : vector<16x256xf32>
    %37 = tpu.matmul %34, %36, %cst_24 {dimension_numbers = #tpu.dot_dimension_numbers<[1], [0], [0], [1], [0, 0, 1, 1], [], []>} : vector<16x128xf32>, vector<128x256xf32>, vector<16x256xf32> -> vector<16x256xf32>
    %c0_25 = arith.constant 0 : index
    %c0_26 = arith.constant 0 : index
    %38 = vector.load %arg8[%c0_25, %c0_26] : memref<1x256xf32, #tpu.memory_space<vmem>>, vector<1x256xf32>
    %39 = vector.broadcast %38 : vector<1x256xf32> to vector<16x256xf32>
    %40 = arith.addf %37, %39 : vector<16x256xf32>
    %c0_27 = arith.constant 0 : index
    %c0_28 = arith.constant 0 : index
    %41 = vector.load %arg9[%c0_27, %c0_28] : memref<1x256xf32, #tpu.memory_space<vmem>>, vector<1x256xf32>
    %cst_29 = arith.constant 5.000000e-01 : f32
    %42 = vector.broadcast %cst_29 : f32 to vector<1x256xf32>
    %43 = arith.cmpf ogt, %41, %42 : vector<1x256xf32>
    %cst_30 = arith.constant -9.900000e+01 : f32
    %44 = vector.shape_cast %43 : vector<1x256xi1> to vector<1x256xi1>
    %45 = vector.broadcast %44 : vector<1x256xi1> to vector<16x256xi1>
    %46 = vector.broadcast %cst_30 : f32 to vector<16x256xf32>
    %47 = arith.select %45, %46, %40 : vector<16x256xi1>, vector<16x256xf32>
    %c0_31 = arith.constant 0 : index
    %c0_32 = arith.constant 0 : index
    %48 = vector.load %arg11[%c0_31, %c0_32] : memref<16x256xf32, #tpu.memory_space<vmem>>, vector<16x256xf32>
    tpu.vector_store %arg11[%c0_31, %c0_32], %47 {strides = array<i32>} : memref<16x256xf32, #tpu.memory_space<vmem>>, vector<16x256xf32>,
    %49 = tpu.iota {dimensions = array<i32: 1>} : vector<16x256xi32>
    %c31_i32 = arith.constant 31 : i32
    %50 = vector.broadcast %c31_i32 : i32 to vector<16x256xi32>
    %51 = arith.cmpi slt, %49, %50 : vector<16x256xi32>
    %cst_33 = arith.constant 0xFF800000 : f32
    %52 = vector.broadcast %cst_33 : f32 to vector<16x256xf32>
    %53 = arith.select %51, %47, %52 : vector<16x256xi1>, vector<16x256xf32>
    %cst_34 = arith.constant dense<0xFF800000> : vector<16xf32>
    %54 = vector.multi_reduction <maximumf>, %53, %cst_34 [1] : vector<16x256xf32> to vector<16xf32>
    %55 = vector.shape_cast %54 : vector<16xf32> to vector<16x1xf32>
    %56 = vector.broadcast %55 : vector<16x1xf32> to vector<16x256xf32>
    %57 = arith.subf %53, %56 : vector<16x256xf32>
    %58 = math.exp %57 : vector<16x256xf32>
    %cst_35 = arith.constant dense<0.000000e+00> : vector<16xf32>
    %59 = vector.multi_reduction <add>, %58, %cst_35 [1] : vector<16x256xf32> to vector<16xf32>
    %60 = vector.shape_cast %59 : vector<16xf32> to vector<16x1xf32>
    %61 = tpu.reciprocal %60 {approx = true} : vector<16x1xf32> -> vector<16x1xf32>
    %62 = vector.broadcast %61 : vector<16x1xf32> to vector<16x256xf32>
    %63 = arith.mulf %58, %62 : vector<16x256xf32>
    %c0_36 = arith.constant 0 : index
    %c0_37 = arith.constant 0 : index
    %64 = vector.load %arg12[%c0_36, %c0_37] : memref<16x256xf32, #tpu.memory_space<vmem>>, vector<16x256xf32>
    tpu.vector_store %arg12[%c0_36, %c0_37], %63 {strides = array<i32>} : memref<16x256xf32, #tpu.memory_space<vmem>>, vector<16x256xf32>,
    return
  }
  func.func @transform_0(%arg0: i32) -> (i32, i32) {
    %c0_i32 = arith.constant 0 : i32
    %c0_i32_0 = arith.constant 0 : i32
    %c0_i32_1 = arith.constant 0 : i32
    return %c0_i32, %c0_i32_0 : i32, i32
  }
  func.func @transform_1(%arg0: i32) -> (i32, i32) {
    %c0_i32 = arith.constant 0 : i32
    %c0_i32_0 = arith.constant 0 : i32
    %c0_i32_1 = arith.constant 0 : i32
    return %c0_i32, %c0_i32_0 : i32, i32
  }
  func.func @transform_2(%arg0: i32) -> (i32, i32) {
    %c0_i32 = arith.constant 0 : i32
    %c0_i32_0 = arith.constant 0 : i32
    %c0_i32_1 = arith.constant 0 : i32
    return %c0_i32, %c0_i32_0 : i32, i32
  }
  func.func @transform_3(%arg0: i32) -> (i32, i32) {
    %c0_i32 = arith.constant 0 : i32
    %c0_i32_0 = arith.constant 0 : i32
    %c0_i32_1 = arith.constant 0 : i32
    return %c0_i32, %c0_i32_0 : i32, i32
  }
  func.func @transform_4(%arg0: i32) -> (i32, i32) {
    %c0_i32 = arith.constant 0 : i32
    %c0_i32_0 = arith.constant 0 : i32
    %c0_i32_1 = arith.constant 0 : i32
    return %c0_i32, %c0_i32_0 : i32, i32
  }
  func.func @transform_5(%arg0: i32) -> (i32, i32) {
    %c0_i32 = arith.constant 0 : i32
    %c0_i32_0 = arith.constant 0 : i32
    %c0_i32_1 = arith.constant 0 : i32
    return %c0_i32, %c0_i32_0 : i32, i32
  }
  func.func @transform_6(%arg0: i32) -> (i32, i32) {
    %c0_i32 = arith.constant 0 : i32
    %c0_i32_0 = arith.constant 0 : i32
    %c0_i32_1 = arith.constant 0 : i32
    return %c0_i32, %c0_i32_0 : i32, i32
  }
  func.func @transform_7(%arg0: i32) -> (i32, i32) {
    %c0_i32 = arith.constant 0 : i32
    %c0_i32_0 = arith.constant 0 : i32
    %c0_i32_1 = arith.constant 0 : i32
    return %c0_i32, %c0_i32_0 : i32, i32
  }
  func.func @transform_8(%arg0: i32) -> (i32, i32) {
    %c0_i32 = arith.constant 0 : i32
    %c0_i32_0 = arith.constant 0 : i32
    %c0_i32_1 = arith.constant 0 : i32
    return %c0_i32, %c0_i32_0 : i32, i32
  }
  func.func @transform_9(%arg0: i32) -> (i32, i32) {
    %c0_i32 = arith.constant 0 : i32
    %c0_i32_0 = arith.constant 0 : i32
    %c0_i32_1 = arith.constant 0 : i32
    return %c0_i32, %c0_i32_0 : i32, i32
  }
  func.func @transform_10(%arg0: i32) -> (i32, i32) {
    %c0_i32 = arith.constant 0 : i32
    %c0_i32_0 = arith.constant 0 : i32
    %c0_i32_1 = arith.constant 0 : i32
    return %c0_i32, %c0_i32_0 : i32, i32
  }
  func.func @transform_11(%arg0: i32) -> (i32, i32) {
    %c0_i32 = arith.constant 0 : i32
    %c0_i32_0 = arith.constant 0 : i32
    %c0_i32_1 = arith.constant 0 : i32
    return %c0_i32, %c0_i32_0 : i32, i32
  }
}

</mosaic_0001>

<llo_original>
// kernel: roi_attention_box_head_forward.1
$region0: #{roi_attention_box_head_forward.1}
  #allocation0 [shape = 'u32[]', space=smem, size = 0x4, offset = 0x4, fixed_abs, tag = 'smem constant byte address 0x4 - core index']
  #allocation1 [shape = 'u32[144,128]{1,0:T(1,128)}', space=vmem, size = 0x12000, scoped, tag = 'internal scratch']
  %s0 = inlined_call_operand.vmem [shape: f32[16,1024], index: 0, kind: input, shape index: {}]
  %s1 = inlined_call_operand.vmem [shape: f32[1024,128], index: 1, kind: input, shape index: {}]
  %s2 = inlined_call_operand.vmem [shape: f32[1,128], index: 2, kind: input, shape index: {}]
  %s3 = inlined_call_operand.vmem [shape: f32[128,384], index: 3, kind: input, shape index: {}]
  %s4 = inlined_call_operand.vmem [shape: f32[128,128], index: 4, kind: input, shape index: {}]
  %s5 = inlined_call_operand.vmem [shape: f32[1,128], index: 5, kind: input, shape index: {}]
  %s6 = inlined_call_operand.vmem [shape: f32[128,256], index: 6, kind: input, shape index: {}]
  %s7 = inlined_call_operand.vmem [shape: f32[1,256], index: 7, kind: input, shape index: {}]
  %s8 = inlined_call_operand.vmem [shape: f32[1,256], index: 8, kind: input, shape index: {}]
  %s9 = inlined_call_operand.hbm [shape: f32[16,128], index: 9, kind: output, shape index: {0}]
  %s10 = inlined_call_operand.vmem [shape: f32[16,256], index: 10, kind: output, shape index: {1}]
  %s11 = inlined_call_operand.vmem [shape: f32[16,256], index: 11, kind: output, shape index: {2}]
  %12 = xla_tuple %s9, %s10, %s11
  %s13 = sld [smem:[#allocation0]]
  $region62: #{roi_attention_box_head_forward.1} parent=0
    _
  %s15 = ssub.s32 1, %s13
  %s16 = scalar_select 0, %s15, %s13
  $region1: #{roi_attention_box_head_forward.1} parent=0
    #allocation2 [shape = 'u8[8192]{0}', space=vmem, size = 0x2000, scoped, tag = 'output window, operand 0, single buffered']
    #allocation3 [shape = 's32[1]{0}', space=sflag, size = 0x4, scoped, tag = 'scoped memory for roi_attention_box_head_forward.1']
    %17 = vsyncpa [#allocation3], 0
    // Predicated region
    $region2: #{roi_attention_box_head_forward.1} parent=1 // pred_check
      _
    $region3: #{roi_attention_box_head_forward.1} parent=1 // pred_check_branch
      %19 = sbr.rel (0) target = $region5
    $region4: #{roi_attention_box_head_forward.1} parent=1 // pred_region
      _
    $region5: #{roi_attention_box_head_forward.1} parent=1 // pred_fallthru
      _
    // Predicated region
    $region6: #{roi_attention_box_head_forward.1} parent=1 // pred_check
      _
    $region7: #{roi_attention_box_head_forward.1} parent=1 // pred_check_branch
      %21 = sbr.rel (0) target = $region9
    $region8: #{roi_attention_box_head_forward.1} parent=1 // pred_region
      _
    $region9: #{roi_attention_box_head_forward.1} parent=1 // pred_fallthru
      _
    // Predicated region
    $region10: #{roi_attention_box_head_forward.1} parent=1 // pred_check
      _
    $region11: #{roi_attention_box_head_forward.1} parent=1 // pred_check_branch
      %23 = sbr.rel (0) target = $region13
    $region12: #{roi_attention_box_head_forward.1} parent=1 // pred_region
      _
    $region13: #{roi_attention_box_head_forward.1} parent=1 // pred_fallthru
      _
    // Predicated region
    $region14: #{roi_attention_box_head_forward.1} parent=1 // pred_check
      _
    $region15: #{roi_attention_box_head_forward.1} parent=1 // pred_check_branch
      %25 = sbr.rel (0) target = $region17
    $region16: #{roi_attention_box_head_forward.1} parent=1 // pred_region
      _
    $region17: #{roi_attention_box_head_forward.1} parent=1 // pred_fallthru
      _
    // Predicated region
    $region18: #{roi_attention_box_head_forward.1} parent=1 // pred_check
      _
    $region19: #{roi_attention_box_head_forward.1} parent=1 // pred_check_branch
      %27 = sbr.rel (0) target = $region21
    $region20: #{roi_attention_box_head_forward.1} parent=1 // pred_region
      _
    $region21: #{roi_attention_box_head_forward.1} parent=1 // pred_fallthru
      _
    // Predicated region
    $region22: #{roi_attention_box_head_forward.1} parent=1 // pred_check
      _
    $region23: #{roi_attention_box_head_forward.1} parent=1 // pred_check_branch
      %29 = sbr.rel (0) target = $region25
    $region24: #{roi_attention_box_head_forward.1} parent=1 // pred_region
      _
    $region25: #{roi_attention_box_head_forward.1} parent=1 // pred_fallthru
      _
    // Predicated region
    $region26: #{roi_attention_box_head_forward.1} parent=1 // pred_check
      _
    $region27: #{roi_attention_box_head_forward.1} parent=1 // pred_check_branch
      %31 = sbr.rel (0) target = $region29
    $region28: #{roi_attention_box_head_forward.1} parent=1 // pred_region
      _
    $region29: #{roi_attention_box_head_forward.1} parent=1 // pred_fallthru
      _
    // Predicated region
    $region30: #{roi_attention_box_head_forward.1} parent=1 // pred_check
      _
    $region31: #{roi_attention_box_head_forward.1} parent=1 // pred_check_branch
      %33 = sbr.rel (0) target = $region33
    $region32: #{roi_attention_box_head_forward.1} parent=1 // pred_region
      _
    $region33: #{roi_attention_box_head_forward.1} parent=1 // pred_fallthru
      _
    // Predicated region
    $region34: #{roi_attention_box_head_forward.1} parent=1 // pred_check
      _
    $region35: #{roi_attention_box_head_forward.1} parent=1 // pred_check_branch
      %35 = sbr.rel (0) target = $region37
    $region36: #{roi_attention_box_head_forward.1} parent=1 // pred_region
      _
    $region37: #{roi_attention_box_head_forward.1} parent=1 // pred_fallthru
      _
    %v36 = vld [vmem:[%s0] sm:$0xff]
    %v37 = vld [vmem:[%s0 + $0x8] sm:$0xff]
    %v38 = vld [vmem:[%s0 + $0x10] sm:$0xff]
    %v39 = vld [vmem:[%s0 + $0x18] sm:$0xff]
    %v40 = vld [vmem:[%s0 + $0x20] sm:$0xff]
    %v41 = vld [vmem:[%s0 + $0x28] sm:$0xff]
    %v42 = vld [vmem:[%s0 + $0x30] sm:$0xff]
    %v43 = vld [vmem:[%s0 + $0x38] sm:$0xff]
    %v44 = vld [vmem:[%s0 + $0x40] sm:$0xff]
    %v45 = vld [vmem:[%s0 + $0x48] sm:$0xff]
    %v46 = vld [vmem:[%s0 + $0x50] sm:$0xff]
    %v47 = vld [vmem:[%s0 + $0x58] sm:$0xff]
    %v48 = vld [vmem:[%s0 + $0x60] sm:$0xff]
    %v49 = vld [vmem:[%s0 + $0x68] sm:$0xff]
    %v50 = vld [vmem:[%s0 + $0x70] sm:$0xff]
    %v51 = vld [vmem:[%s0 + $0x78] sm:$0xff]
    %v52 = vld [vmem:[%s1] sm:$0xff]
    %v53 = vld [vmem:[%s1 + $0x8] sm:$0xff]
    %v54 = vld [vmem:[%s1 + $0x10] sm:$0xff]
    %v55 = vld [vmem:[%s1 + $0x18] sm:$0xff]
    %v56 = vld [vmem:[%s1 + $0x20] sm:$0xff]
    %v57 = vld [vmem:[%s1 + $0x28] sm:$0xff]
    %v58 = vld [vmem:[%s1 + $0x30] sm:$0xff]
    %v59 = vld [vmem:[%s1 + $0x38] sm:$0xff]
    %v60 = vld [vmem:[%s1 + $0x40] sm:$0xff]
    %v61 = vld [vmem:[%s1 + $0x48] sm:$0xff]
    %v62 = vld [vmem:[%s1 + $0x50] sm:$0xff]
    %v63 = vld [vmem:[%s1 + $0x58] sm:$0xff]
    %v64 = vld [vmem:[%s1 + $0x60] sm:$0xff]
    %v65 = vld [vmem:[%s1 + $0x68] sm:$0xff]
    %v66 = vld [vmem:[%s1 + $0x70] sm:$0xff]
    %v67 = vld [vmem:[%s1 + $0x78] sm:$0xff]
    %v68 = vld [vmem:[%s1 + $0x80] sm:$0xff]
    %v69 = vld [vmem:[%s1 + $0x88] sm:$0xff]
    %v70 = vld [vmem:[%s1 + $0x90] sm:$0xff]
    %v71 = vld [vmem:[%s1 + $0x98] sm:$0xff]
    %v72 = vld [vmem:[%s1 + $0xa0] sm:$0xff]
    %v73 = vld [vmem:[%s1 + $0xa8] sm:$0xff]
    %v74 = vld [vmem:[%s1 + $0xb0] sm:$0xff]
    %v75 = vld [vmem:[%s1 + $0xb8] sm:$0xff]
    %v76 = vld [vmem:[%s1 + $0xc0] sm:$0xff]
    %v77 = vld [vmem:[%s1 + $0xc8] sm:$0xff]
    %v78 = vld [vmem:[%s1 + $0xd0] sm:$0xff]
    %v79 = vld [vmem:[%s1 + $0xd8] sm:$0xff]
    %v80 = vld [vmem:[%s1 + $0xe0] sm:$0xff]
    %v81 = vld [vmem:[%s1 + $0xe8] sm:$0xff]
    %v82 = vld [vmem:[%s1 + $0xf0] sm:$0xff]
    %v83 = vld [vmem:[%s1 + $0xf8] sm:$0xff]
    %v84 = vld [vmem:[%s1 + $0x100] sm:$0xff]
    %v85 = vld [vmem:[%s1 + $0x108] sm:$0xff]
    %v86 = vld [vmem:[%s1 + $0x110] sm:$0xff]
    %v87 = vld [vmem:[%s1 + $0x118] sm:$0xff]
    %v88 = vld [vmem:[%s1 + $0x120] sm:$0xff]
    %v89 = vld [vmem:[%s1 + $0x128] sm:$0xff]
    %v90 = vld [vmem:[%s1 + $0x130] sm:$0xff]
    %v91 = vld [vmem:[%s1 + $0x138] sm:$0xff]
    %v92 = vld [vmem:[%s1 + $0x140] sm:$0xff]
    %v93 = vld [vmem:[%s1 + $0x148] sm:$0xff]
    %v94 = vld [vmem:[%s1 + $0x150] sm:$0xff]
    %v95 = vld [vmem:[%s1 + $0x158] sm:$0xff]
    %v96 = vld [vmem:[%s1 + $0x160] sm:$0xff]
    %v97 = vld [vmem:[%s1 + $0x168] sm:$0xff]
    %v98 = vld [vmem:[%s1 + $0x170] sm:$0xff]
    %v99 = vld [vmem:[%s1 + $0x178] sm:$0xff]
    %v100 = vld [vmem:[%s1 + $0x180] sm:$0xff]
    %v101 = vld [vmem:[%s1 + $0x188] sm:$0xff]
    %v102 = vld [vmem:[%s1 + $0x190] sm:$0xff]
    %v103 = vld [vmem:[%s1 + $0x198] sm:$0xff]
    %v104 = vld [vmem:[%s1 + $0x1a0] sm:$0xff]
    %v105 = vld [vmem:[%s1 + $0x1a8] sm:$0xff]
    %v106 = vld [vmem:[%s1 + $0x1b0] sm:$0xff]
    %v107 = vld [vmem:[%s1 + $0x1b8] sm:$0xff]
    %v108 = vld [vmem:[%s1 + $0x1c0] sm:$0xff]
    %v109 = vld [vmem:[%s1 + $0x1c8] sm:$0xff]
    %v110 = vld [vmem:[%s1 + $0x1d0] sm:$0xff]
    %v111 = vld [vmem:[%s1 + $0x1d8] sm:$0xff]
    %v112 = vld [vmem:[%s1 + $0x1e0] sm:$0xff]
    %v113 = vld [vmem:[%s1 + $0x1e8] sm:$0xff]
    %v114 = vld [vmem:[%s1 + $0x1f0] sm:$0xff]
    %v115 = vld [vmem:[%s1 + $0x1f8] sm:$0xff]
    %v116 = vld [vmem:[%s1 + $0x200] sm:$0xff]
    %v117 = vld [vmem:[%s1 + $0x208] sm:$0xff]
    %v118 = vld [vmem:[%s1 + $0x210] sm:$0xff]
    %v119 = vld [vmem:[%s1 + $0x218] sm:$0xff]
    %v120 = vld [vmem:[%s1 + $0x220] sm:$0xff]
    %v121 = vld [vmem:[%s1 + $0x228] sm:$0xff]
    %v122 = vld [vmem:[%s1 + $0x230] sm:$0xff]
    %v123 = vld [vmem:[%s1 + $0x238] sm:$0xff]
    %v124 = vld [vmem:[%s1 + $0x240] sm:$0xff]
    %v125 = vld [vmem:[%s1 + $0x248] sm:$0xff]
    %v126 = vld [vmem:[%s1 + $0x250] sm:$0xff]
    %v127 = vld [vmem:[%s1 + $0x258] sm:$0xff]
    %v128 = vld [vmem:[%s1 + $0x260] sm:$0xff]
    %v129 = vld [vmem:[%s1 + $0x268] sm:$0xff]
    %v130 = vld [vmem:[%s1 + $0x270] sm:$0xff]
    %v131 = vld [vmem:[%s1 + $0x278] sm:$0xff]
    %v132 = vld [vmem:[%s1 + $0x280] sm:$0xff]
    %v133 = vld [vmem:[%s1 + $0x288] sm:$0xff]
    %v134 = vld [vmem:[%s1 + $0x290] sm:$0xff]
    %v135 = vld [vmem:[%s1 + $0x298] sm:$0xff]
    %v136 = vld [vmem:[%s1 + $0x2a0] sm:$0xff]
    %v137 = vld [vmem:[%s1 + $0x2a8] sm:$0xff]
    %v138 = vld [vmem:[%s1 + $0x2b0] sm:$0xff]
    %v139 = vld [vmem:[%s1 + $0x2b8] sm:$0xff]
    %v140 = vld [vmem:[%s1 + $0x2c0] sm:$0xff]
    %v141 = vld [vmem:[%s1 + $0x2c8] sm:$0xff]
    %v142 = vld [vmem:[%s1 + $0x2d0] sm:$0xff]
    %v143 = vld [vmem:[%s1 + $0x2d8] sm:$0xff]
    %v144 = vld [vmem:[%s1 + $0x2e0] sm:$0xff]
    %v145 = vld [vmem:[%s1 + $0x2e8] sm:$0xff]
    %v146 = vld [vmem:[%s1 + $0x2f0] sm:$0xff]
    %v147 = vld [vmem:[%s1 + $0x2f8] sm:$0xff]
    %v148 = vld [vmem:[%s1 + $0x300] sm:$0xff]
    %v149 = vld [vmem:[%s1 + $0x308] sm:$0xff]
    %v150 = vld [vmem:[%s1 + $0x310] sm:$0xff]
    %v151 = vld [vmem:[%s1 + $0x318] sm:$0xff]
    %v152 = vld [vmem:[%s1 + $0x320] sm:$0xff]
    %v153 = vld [vmem:[%s1 + $0x328] sm:$0xff]
    %v154 = vld [vmem:[%s1 + $0x330] sm:$0xff]
    %v155 = vld [vmem:[%s1 + $0x338] sm:$0xff]
    %v156 = vld [vmem:[%s1 + $0x340] sm:$0xff]
    %v157 = vld [vmem:[%s1 + $0x348] sm:$0xff]
    %v158 = vld [vmem:[%s1 + $0x350] sm:$0xff]
    %v159 = vld [vmem:[%s1 + $0x358] sm:$0xff]
    %v160 = vld [vmem:[%s1 + $0x360] sm:$0xff]
    %v161 = vld [vmem:[%s1 + $0x368] sm:$0xff]
    %v162 = vld [vmem:[%s1 + $0x370] sm:$0xff]
    %v163 = vld [vmem:[%s1 + $0x378] sm:$0xff]
    %v164 = vld [vmem:[%s1 + $0x380] sm:$0xff]
    %v165 = vld [vmem:[%s1 + $0x388] sm:$0xff]
    %v166 = vld [vmem:[%s1 + $0x390] sm:$0xff]
    %v167 = vld [vmem:[%s1 + $0x398] sm:$0xff]
    %v168 = vld [vmem:[%s1 + $0x3a0] sm:$0xff]
    %v169 = vld [vmem:[%s1 + $0x3a8] sm:$0xff]
    %v170 = vld [vmem:[%s1 + $0x3b0] sm:$0xff]
    %v171 = vld [vmem:[%s1 + $0x3b8] sm:$0xff]
    %v172 = vld [vmem:[%s1 + $0x3c0] sm:$0xff]
    %v173 = vld [vmem:[%s1 + $0x3c8] sm:$0xff]
    %v174 = vld [vmem:[%s1 + $0x3d0] sm:$0xff]
    %v175 = vld [vmem:[%s1 + $0x3d8] sm:$0xff]
    %v176 = vld [vmem:[%s1 + $0x3e0] sm:$0xff]
    %v177 = vld [vmem:[%s1 + $0x3e8] sm:$0xff]
    %v178 = vld [vmem:[%s1 + $0x3f0] sm:$0xff]
    %v179 = vld [vmem:[%s1 + $0x3f8] sm:$0xff]
    %v180 = vld [vmem:[%s2] sm:$0x1]
    %v182 = vlaneseq
    %v183 = vshrl.u32 %v182, 7
    %v184 = vsub.s32 0, %v183
    %v185 = vrot.slane %v180, %v184
    %187 = vmatprep.subr.mxu0 0.0
    %188 = vmatpush1.msra.mxu0 %v52
    %189 = vmatprep.subr.mxu0 0.0
    %190 = vmatpush1.msra.mxu0 %v53
    %191 = vmatprep.subr.mxu0 0.0
    %192 = vmatpush1.msra.mxu0 %v54
    %193 = vmatprep.subr.mxu0 0.0
    %194 = vmatpush1.msra.mxu0 %v55
    %195 = vmatprep.subr.mxu0 0.0
    %196 = vmatpush1.msra.mxu0 %v56
    %197 = vmatprep.subr.mxu0 0.0
    %198 = vmatpush1.msra.mxu0 %v57
    %199 = vmatprep.subr.mxu0 0.0
    %200 = vmatpush1.msra.mxu0 %v58
    %201 = vmatprep.subr.mxu0 0.0
    %202 = vmatpush1.msra.mxu0 %v59
    %203 = vmatprep.subr.mxu0 0.0
    %204 = vmatpush1.msra.mxu0 %v60
    %205 = vmatprep.subr.mxu0 0.0
    %206 = vmatpush1.msra.mxu0 %v61
    %207 = vmatprep.subr.mxu0 0.0
    %208 = vmatpush1.msra.mxu0 %v62
    %209 = vmatprep.subr.mxu0 0.0
    %210 = vmatpush1.msra.mxu0 %v63
    %211 = vmatprep.subr.mxu0 0.0
    %212 = vmatpush1.msra.mxu0 %v64
    %213 = vmatprep.subr.mxu0 0.0
    %214 = vmatpush1.msra.mxu0 %v65
    %215 = vmatprep.subr.mxu0 0.0
    %216 = vmatpush1.msra.mxu0 %v66
    %217 = vmatprep.subr.mxu0 0.0
    %218 = vmatpush1.msra.mxu0 %v67
    %219 = vmatprep.subr.mxu0 0.0
    %220 = vmatpush1.msra.mxu0 %v68
    %221 = vmatprep.subr.mxu0 0.0
    %222 = vmatpush1.msra.mxu0 %v69
    %223 = vmatprep.subr.mxu0 0.0
    %224 = vmatpush1.msra.mxu0 %v70
    %225 = vmatprep.subr.mxu0 0.0
    %226 = vmatpush1.msra.mxu0 %v71
    %227 = vmatprep.subr.mxu0 0.0
    %228 = vmatpush1.msra.mxu0 %v72
    %229 = vmatprep.subr.mxu0 0.0
    %230 = vmatpush1.msra.mxu0 %v73
    %231 = vmatprep.subr.mxu0 0.0
    %232 = vmatpush1.msra.mxu0 %v74
    %233 = vmatprep.subr.mxu0 0.0
    %234 = vmatpush1.msra.mxu0 %v75
    %235 = vmatprep.subr.mxu0 0.0
    %236 = vmatpush1.msra.mxu0 %v76
    %237 = vmatprep.subr.mxu0 0.0
    %238 = vmatpush1.msra.mxu0 %v77
    %239 = vmatprep.subr.mxu0 0.0
    %240 = vmatpush1.msra.mxu0 %v78
    %241 = vmatprep.subr.mxu0 0.0
    %242 = vmatpush1.msra.mxu0 %v79
    %243 = vmatprep.subr.mxu0 0.0
    %244 = vmatpush1.msra.mxu0 %v80
    %245 = vmatprep.subr.mxu0 0.0
    %246 = vmatpush1.msra.mxu0 %v81
    %247 = vmatprep.subr.mxu0 0.0
    %248 = vmatpush1.msra.mxu0 %v82
    %249 = vmatprep.subr.mxu0 0.0
    %250 = vmatpush1.msra.mxu0 %v83
    %251 = vmatprep.mubr.f32.mxu0 %v37
    %252 = vmatmul.mubr.f32.gmra.mrb[0].mxu0 %v36
    %v253 = vpop.f32.mrb[0].mxu0
    %v254 = vadd.f32 %v185, %v253
    %v255 = vpop.f32.mrb[0].mxu0
    %256 = vmatprep.mubr.f32.mxu0 %v45
    %257 = vmatmul.mubr.f32.gmra.mrb[0].mxu0 %v44
    %v258 = vpop.f32.mrb[0].mxu0
    %v259 = vadd.f32 %v185, %v258
    %v260 = vpop.f32.mrb[0].mxu0
    %261 = vdwg.mxu0
    %262 = vmatprep.subr.mxu0 0.0
    %263 = vmatpush1.msra.mxu0 %v84
    %264 = vmatprep.subr.mxu0 0.0
    %265 = vmatpush1.msra.mxu0 %v85
    %266 = vmatprep.subr.mxu0 0.0
    %267 = vmatpush1.msra.mxu0 %v86
    %268 = vmatprep.subr.mxu0 0.0
    %269 = vmatpush1.msra.mxu0 %v87
    %270 = vmatprep.subr.mxu0 0.0
    %271 = vmatpush1.msra.mxu0 %v88
    %272 = vmatprep.subr.mxu0 0.0
    %273 = vmatpush1.msra.mxu0 %v89
    %274 = vmatprep.subr.mxu0 0.0
    %275 = vmatpush1.msra.mxu0 %v90
    %276 = vmatprep.subr.mxu0 0.0
    %277 = vmatpush1.msra.mxu0 %v91
    %278 = vmatprep.subr.mxu0 0.0
    %279 = vmatpush1.msra.mxu0 %v92
    %280 = vmatprep.subr.mxu0 0.0
    %281 = vmatpush1.msra.mxu0 %v93
    %282 = vmatprep.subr.mxu0 0.0
    %283 = vmatpush1.msra.mxu0 %v94
    %284 = vmatprep.subr.mxu0 0.0
    %285 = vmatpush1.msra.mxu0 %v95
    %286 = vmatprep.subr.mxu0 0.0
    %287 = vmatpush1.msra.mxu0 %v96
    %288 = vmatprep.subr.mxu0 0.0
    %289 = vmatpush1.msra.mxu0 %v97
    %290 = vmatprep.subr.mxu0 0.0
    %291 = vmatpush1.msra.mxu0 %v98
    %292 = vmatprep.subr.mxu0 0.0
    %293 = vmatpush1.msra.mxu0 %v99
    %294 = vmatprep.subr.mxu0 0.0
    %295 = vmatpush1.msra.mxu0 %v100
    %296 = vmatprep.subr.mxu0 0.0
    %297 = vmatpush1.msra.mxu0 %v101
    %298 = vmatprep.subr.mxu0 0.0
    %299 = vmatpush1.msra.mxu0 %v102
    %300 = vmatprep.subr.mxu0 0.0
    %301 = vmatpush1.msra.mxu0 %v103
    %302 = vmatprep.subr.mxu0 0.0
    %303 = vmatpush1.msra.mxu0 %v104
    %304 = vmatprep.subr.mxu0 0.0
    %305 = vmatpush1.msra.mxu0 %v105
    %306 = vmatprep.subr.mxu0 0.0
    %307 = vmatpush1.msra.mxu0 %v106
    %308 = vmatprep.subr.mxu0 0.0
    %309 = vmatpush1.msra.mxu0 %v107
    %310 = vmatprep.subr.mxu0 0.0
    %311 = vmatpush1.msra.mxu0 %v108
    %312 = vmatprep.subr.mxu0 0.0
    %313 = vmatpush1.msra.mxu0 %v109
    %314 = vmatprep.subr.mxu0 0.0
    %315 = vmatpush1.msra.mxu0 %v110
    %316 = vmatprep.subr.mxu0 0.0
    %317 = vmatpush1.msra.mxu0 %v111
    %318 = vmatprep.subr.mxu0 0.0
    %319 = vmatpush1.msra.mxu0 %v112
    %320 = vmatprep.subr.mxu0 0.0
    %321 = vmatpush1.msra.mxu0 %v113
    %322 = vmatprep.subr.mxu0 0.0
    %323 = vmatpush1.msra.mxu0 %v114
    %324 = vmatprep.subr.mxu0 0.0
    %325 = vmatpush1.msra.mxu0 %v115
    %326 = vmatprep.mubr.f32.mxu0 %v39
    %327 = vmatmul.mubr.f32.gmra.mrb[0].mxu0 %v38
    %v328 = vpop.f32.mrb[0].mxu0
    %v329 = vadd.f32 %v254, %v328
    %v330 = vpop.f32.mrb[0].mxu0
    %331 = vmatprep.mubr.f32.mxu0 %v47
    %332 = vmatmul.mubr.f32.gmra.mrb[0].mxu0 %v46
    %v333 = vpop.f32.mrb[0].mxu0
    %v334 = vadd.f32 %v259, %v333
    %v335 = vpop.f32.mrb[0].mxu0
    %336 = vdwg.mxu0
    %337 = vmatprep.subr.mxu0 0.0
    %338 = vmatpush1.msra.mxu0 %v116
    %339 = vmatprep.subr.mxu0 0.0
    %340 = vmatpush1.msra.mxu0 %v117
    %341 = vmatprep.subr.mxu0 0.0
    %342 = vmatpush1.msra.mxu0 %v118
    %343 = vmatprep.subr.mxu0 0.0
    %344 = vmatpush1.msra.mxu0 %v119
    %345 = vmatprep.subr.mxu0 0.0
    %346 = vmatpush1.msra.mxu0 %v120
    %347 = vmatprep.subr.mxu0 0.0
    %348 = vmatpush1.msra.mxu0 %v121
    %349 = vmatprep.subr.mxu0 0.0
    %350 = vmatpush1.msra.mxu0 %v122
    %351 = vmatprep.subr.mxu0 0.0
    %352 = vmatpush1.msra.mxu0 %v123
    %353 = vmatprep.subr.mxu0 0.0
    %354 = vmatpush1.msra.mxu0 %v124
    %355 = vmatprep.subr.mxu0 0.0
    %356 = vmatpush1.msra.mxu0 %v125
    %357 = vmatprep.subr.mxu0 0.0
    %358 = vmatpush1.msra.mxu0 %v126
    %359 = vmatprep.subr.mxu0 0.0
    %360 = vmatpush1.msra.mxu0 %v127
    %361 = vmatprep.subr.mxu0 0.0
    %362 = vmatpush1.msra.mxu0 %v128
    %363 = vmatprep.subr.mxu0 0.0
    %364 = vmatpush1.msra.mxu0 %v129
    %365 = vmatprep.subr.mxu0 0.0
    %366 = vmatpush1.msra.mxu0 %v130
    %367 = vmatprep.subr.mxu0 0.0
    %368 = vmatpush1.msra.mxu0 %v131
    %369 = vmatprep.subr.mxu0 0.0
    %370 = vmatpush1.msra.mxu0 %v132
    %371 = vmatprep.subr.mxu0 0.0
    %372 = vmatpush1.msra.mxu0 %v133
    %373 = vmatprep.subr.mxu0 0.0
    %374 = vmatpush1.msra.mxu0 %v134
    %375 = vmatprep.subr.mxu0 0.0
    %376 = vmatpush1.msra.mxu0 %v135
    %377 = vmatprep.subr.mxu0 0.0
    %378 = vmatpush1.msra.mxu0 %v136
    %379 = vmatprep.subr.mxu0 0.0
    %380 = vmatpush1.msra.mxu0 %v137
    %381 = vmatprep.subr.mxu0 0.0
    %382 = vmatpush1.msra.mxu0 %v138
    %383 = vmatprep.subr.mxu0 0.0
    %384 = vmatpush1.msra.mxu0 %v139
    %385 = vmatprep.subr.mxu0 0.0
    %386 = vmatpush1.msra.mxu0 %v140
    %387 = vmatprep.subr.mxu0 0.0
    %388 = vmatpush1.msra.mxu0 %v141
    %389 = vmatprep.subr.mxu0 0.0
    %390 = vmatpush1.msra.mxu0 %v142
    %391 = vmatprep.subr.mxu0 0.0
    %392 = vmatpush1.msra.mxu0 %v143
    %393 = vmatprep.subr.mxu0 0.0
    %394 = vmatpush1.msra.mxu0 %v144
    %395 = vmatprep.subr.mxu0 0.0
    %396 = vmatpush1.msra.mxu0 %v145
    %397 = vmatprep.subr.mxu0 0.0
    %398 = vmatpush1.msra.mxu0 %v146
    %399 = vmatprep.subr.mxu0 0.0
    %400 = vmatpush1.msra.mxu0 %v147
    %401 = vmatprep.mubr.f32.mxu0 %v41
    %402 = vmatmul.mubr.f32.gmra.mrb[0].mxu0 %v40
    %v403 = vpop.f32.mrb[0].mxu0
    %v404 = vadd.f32 %v329, %v403
    %v405 = vpop.f32.mrb[0].mxu0
    %406 = vmatprep.mubr.f32.mxu0 %v49
    %407 = vmatmul.mubr.f32.gmra.mrb[0].mxu0 %v48
    %v408 = vpop.f32.mrb[0].mxu0
    %v409 = vadd.f32 %v334, %v408
    %v410 = vpop.f32.mrb[0].mxu0
    %411 = vdwg.mxu0
    %412 = vmatprep.subr.mxu0 0.0
    %413 = vmatpush1.msra.mxu0 %v148
    %414 = vmatprep.subr.mxu0 0.0
    %415 = vmatpush1.msra.mxu0 %v149
    %416 = vmatprep.subr.mxu0 0.0
    %417 = vmatpush1.msra.mxu0 %v150
    %418 = vmatprep.subr.mxu0 0.0
    %419 = vmatpush1.msra.mxu0 %v151
    %420 = vmatprep.subr.mxu0 0.0
    %421 = vmatpush1.msra.mxu0 %v152
    %422 = vmatprep.subr.mxu0 0.0
    %423 = vmatpush1.msra.mxu0 %v153
    %424 = vmatprep.subr.mxu0 0.0
    %425 = vmatpush1.msra.mxu0 %v154
    %426 = vmatprep.subr.mxu0 0.0
    %427 = vmatpush1.msra.mxu0 %v155
    %428 = vmatprep.subr.mxu0 0.0
    %429 = vmatpush1.msra.mxu0 %v156
    %430 = vmatprep.subr.mxu0 0.0
    %431 = vmatpush1.msra.mxu0 %v157
    %432 = vmatprep.subr.mxu0 0.0
    %433 = vmatpush1.msra.mxu0 %v158
    %434 = vmatprep.subr.mxu0 0.0
    %435 = vmatpush1.msra.mxu0 %v159
    %436 = vmatprep.subr.mxu0 0.0
    %437 = vmatpush1.msra.mxu0 %v160
    %438 = vmatprep.subr.mxu0 0.0
    %439 = vmatpush1.msra.mxu0 %v161
    %440 = vmatprep.subr.mxu0 0.0
    %441 = vmatpush1.msra.mxu0 %v162
    %442 = vmatprep.subr.mxu0 0.0
    %443 = vmatpush1.msra.mxu0 %v163
    %444 = vmatprep.subr.mxu0 0.0
    %445 = vmatpush1.msra.mxu0 %v164
    %446 = vmatprep.subr.mxu0 0.0
    %447 = vmatpush1.msra.mxu0 %v165
    %448 = vmatprep.subr.mxu0 0.0
    %449 = vmatpush1.msra.mxu0 %v166
    %450 = vmatprep.subr.mxu0 0.0
    %451 = vmatpush1.msra.mxu0 %v167
    %452 = vmatprep.subr.mxu0 0.0
    %453 = vmatpush1.msra.mxu0 %v168
    %454 = vmatprep.subr.mxu0 0.0
    %455 = vmatpush1.msra.mxu0 %v169
    %456 = vmatprep.subr.mxu0 0.0
    %457 = vmatpush1.msra.mxu0 %v170
    %458 = vmatprep.subr.mxu0 0.0
    %459 = vmatpush1.msra.mxu0 %v171
    %460 = vmatprep.subr.mxu0 0.0
    %461 = vmatpush1.msra.mxu0 %v172
    %462 = vmatprep.subr.mxu0 0.0
    %463 = vmatpush1.msra.mxu0 %v173
    %464 = vmatprep.subr.mxu0 0.0
    %465 = vmatpush1.msra.mxu0 %v174
    %466 = vmatprep.subr.mxu0 0.0
    %467 = vmatpush1.msra.mxu0 %v175
    %468 = vmatprep.subr.mxu0 0.0
    %469 = vmatpush1.msra.mxu0 %v176
    %470 = vmatprep.subr.mxu0 0.0
    %471 = vmatpush1.msra.mxu0 %v177
    %472 = vmatprep.subr.mxu0 0.0
    %473 = vmatpush1.msra.mxu0 %v178
    %474 = vmatprep.subr.mxu0 0.0
    %475 = vmatpush1.msra.mxu0 %v179
    %476 = vmatprep.mubr.f32.mxu0 %v43
    %477 = vmatmul.mubr.f32.gmra.mrb[0].mxu0 %v42
    %v478 = vpop.f32.mrb[0].mxu0
    %v479 = vadd.f32 %v404, %v478
    %v480 = vpop.f32.mrb[0].mxu0
    %481 = vmatprep.mubr.f32.mxu0 %v51
    %482 = vmatmul.mubr.f32.gmra.mrb[0].mxu0 %v50
    %v483 = vpop.f32.mrb[0].mxu0
    %v484 = vadd.f32 %v409, %v483
    %v485 = vpop.f32.mrb[0].mxu0
    %486 = vdwg.mxu0
    %v487 = vmax.f32 %v479, 0.0
    %v488 = vmax.f32 %v484, 0.0
    %v489 = vld [vmem:[%s3] sm:$0xff]
    %v490 = vld [vmem:[%s3 + $0x8] sm:$0xff]
    %v491 = vld [vmem:[%s3 + $0x10] sm:$0xff]
    %v492 = vld [vmem:[%s3 + $0x18] sm:$0xff]
    %v493 = vld [vmem:[%s3 + $0x20] sm:$0xff]
    %v494 = vld [vmem:[%s3 + $0x28] sm:$0xff]
    %v495 = vld [vmem:[%s3 + $0x30] sm:$0xff]
    %v496 = vld [vmem:[%s3 + $0x38] sm:$0xff]
    %v497 = vld [vmem:[%s3 + $0x40] sm:$0xff]
    %v498 = vld [vmem:[%s3 + $0x48] sm:$0xff]
    %v499 = vld [vmem:[%s3 + $0x50] sm:$0xff]
    %v500 = vld [vmem:[%s3 + $0x58] sm:$0xff]
    %v501 = vld [vmem:[%s3 + $0x60] sm:$0xff]
    %v502 = vld [vmem:[%s3 + $0x68] sm:$0xff]
    %v503 = vld [vmem:[%s3 + $0x70] sm:$0xff]
    %v504 = vld [vmem:[%s3 + $0x78] sm:$0xff]
    %v505 = vld [vmem:[%s3 + $0x80] sm:$0xff]
    %v506 = vld [vmem:[%s3 + $0x88] sm:$0xff]
    %v507 = vld [vmem:[%s3 + $0x90] sm:$0xff]
    %v508 = vld [vmem:[%s3 + $0x98] sm:$0xff]
    %v509 = vld [vmem:[%s3 + $0xa0] sm:$0xff]
    %v510 = vld [vmem:[%s3 + $0xa8] sm:$0xff]
    %v511 = vld [vmem:[%s3 + $0xb0] sm:$0xff]
    %v512 = vld [vmem:[%s3 + $0xb8] sm:$0xff]
    %v513 = vld [vmem:[%s3 + $0xc0] sm:$0xff]
    %v514 = vld [vmem:[%s3 + $0xc8] sm:$0xff]
    %v515 = vld [vmem:[%s3 + $0xd0] sm:$0xff]
    %v516 = vld [vmem:[%s3 + $0xd8] sm:$0xff]
    %v517 = vld [vmem:[%s3 + $0xe0] sm:$0xff]
    %v518 = vld [vmem:[%s3 + $0xe8] sm:$0xff]
    %v519 = vld [vmem:[%s3 + $0xf0] sm:$0xff]
    %v520 = vld [vmem:[%s3 + $0xf8] sm:$0xff]
    %v521 = vld [vmem:[%s3 + $0x100] sm:$0xff]
    %v522 = vld [vmem:[%s3 + $0x108] sm:$0xff]
    %v523 = vld [vmem:[%s3 + $0x110] sm:$0xff]
    %v524 = vld [vmem:[%s3 + $0x118] sm:$0xff]
    %v525 = vld [vmem:[%s3 + $0x120] sm:$0xff]
    %v526 = vld [vmem:[%s3 + $0x128] sm:$0xff]
    %v527 = vld [vmem:[%s3 + $0x130] sm:$0xff]
    %v528 = vld [vmem:[%s3 + $0x138] sm:$0xff]
    %v529 = vld [vmem:[%s3 + $0x140] sm:$0xff]
    %v530 = vld [vmem:[%s3 + $0x148] sm:$0xff]
    %v531 = vld [vmem:[%s3 + $0x150] sm:$0xff]
    %v532 = vld [vmem:[%s3 + $0x158] sm:$0xff]
    %v533 = vld [vmem:[%s3 + $0x160] sm:$0xff]
    %v534 = vld [vmem:[%s3 + $0x168] sm:$0xff]
    %v535 = vld [vmem:[%s3 + $0x170] sm:$0xff]
    %v536 = vld [vmem:[%s3 + $0x178] sm:$0xff]
    %537 = vmatprep.subr.mxu0 %v490
    %538 = vmatpush1.msra.mxu0 %v489
    %539 = vmatprep.subr.mxu0 %v493
    %540 = vmatpush1.msra.mxu0 %v492
    %541 = vmatprep.subr.mxu0 %v496
    %542 = vmatpush1.msra.mxu0 %v495
    %543 = vmatprep.subr.mxu0 %v499
    %544 = vmatpush1.msra.mxu0 %v498
    %545 = vmatprep.subr.mxu0 %v502
    %546 = vmatpush1.msra.mxu0 %v501
    %547 = vmatprep.subr.mxu0 %v505
    %548 = vmatpush1.msra.mxu0 %v504
    %549 = vmatprep.subr.mxu0 %v508
    %550 = vmatpush1.msra.mxu0 %v507
    %551 = vmatprep.subr.mxu0 %v511
    %552 = vmatpush1.msra.mxu0 %v510
    %553 = vmatprep.subr.mxu0 %v514
    %554 = vmatpush1.msra.mxu0 %v513
    %555 = vmatprep.subr.mxu0 %v517
    %556 = vmatpush1.msra.mxu0 %v516
    %557 = vmatprep.subr.mxu0 %v520
    %558 = vmatpush1.msra.mxu0 %v519
    %559 = vmatprep.subr.mxu0 %v523
    %560 = vmatpush1.msra.mxu0 %v522
    %561 = vmatprep.subr.mxu0 %v526
    %562 = vmatpush1.msra.mxu0 %v525
    %563 = vmatprep.subr.mxu0 %v529
    %564 = vmatpush1.msra.mxu0 %v528
    %565 = vmatprep.subr.mxu0 %v532
    %566 = vmatpush1.msra.mxu0 %v531
    %567 = vmatprep.subr.mxu0 %v535
    %568 = vmatpush1.msra.mxu0 %v534
    %569 = vmatprep.subr.mxu0 0.0
    %570 = vmatpush1.msra.mxu0 0.0
    %571 = vmatprep.subr.mxu0 0.0
    %572 = vmatpush1.msra.mxu0 0.0
    %573 = vmatprep.subr.mxu0 0.0
    %574 = vmatpush1.msra.mxu0 0.0
    %575 = vmatprep.subr.mxu0 0.0
    %576 = vmatpush1.msra.mxu0 0.0
    %577 = vmatprep.subr.mxu0 0.0
    %578 = vmatpush1.msra.mxu0 0.0
    %579 = vmatprep.subr.mxu0 0.0
    %580 = vmatpush1.msra.mxu0 0.0
    %581 = vmatprep.subr.mxu0 0.0
    %582 = vmatpush1.msra.mxu0 0.0
    %583 = vmatprep.subr.mxu0 0.0
    %584 = vmatpush1.msra.mxu0 0.0
    %585 = vmatprep.subr.mxu0 0.0
    %586 = vmatpush1.msra.mxu0 0.0
    %587 = vmatprep.subr.mxu0 0.0
    %588 = vmatpush1.msra.mxu0 0.0
    %589 = vmatprep.subr.mxu0 0.0
    %590 = vmatpush1.msra.mxu0 0.0
    %591 = vmatprep.subr.mxu0 0.0
    %592 = vmatpush1.msra.mxu0 0.0
    %593 = vmatprep.subr.mxu0 0.0
    %594 = vmatpush1.msra.mxu0 0.0
    %595 = vmatprep.subr.mxu0 0.0
    %596 = vmatpush1.msra.mxu0 0.0
    %597 = vmatprep.subr.mxu0 0.0
    %598 = vmatpush1.msra.mxu0 0.0
    %599 = vmatprep.subr.mxu0 0.0
    %600 = vmatpush1.msra.mxu0 0.0
    %601 = vmatprep.mubr.f32.mxu0 0.0
    %602 = vmatmul.mubr.f32.gmra.mrb[0].mxu0 %v487
    %v603 = vpop.f32.mrb[0].mxu0
    %v604 = vadd.f32 0.0, %v603
    %v605 = vpop.f32.mrb[0].mxu0
    %v606 = vadd.f32 0.0, %v605
    %607 = vmatprep.mubr.f32.mxu0 0.0
    %608 = vmatmul.mubr.f32.gmra.mrb[0].mxu0 %v488
    %v609 = vpop.f32.mrb[0].mxu0
    %v610 = vadd.f32 0.0, %v609
    %v611 = vpop.f32.mrb[0].mxu0
    %v612 = vadd.f32 0.0, %v611
    %613 = vdwg.mxu0
    %614 = vmatprep.subr.mxu0 0.0
    %615 = vmatpush1.msra.mxu0 %v491
    %616 = vmatprep.subr.mxu0 0.0
    %617 = vmatpush1.msra.mxu0 %v494
    %618 = vmatprep.subr.mxu0 0.0
    %619 = vmatpush1.msra.mxu0 %v497
    %620 = vmatprep.subr.mxu0 0.0
    %621 = vmatpush1.msra.mxu0 %v500
    %622 = vmatprep.subr.mxu0 0.0
    %623 = vmatpush1.msra.mxu0 %v503
    %624 = vmatprep.subr.mxu0 0.0
    %625 = vmatpush1.msra.mxu0 %v506
    %626 = vmatprep.subr.mxu0 0.0
    %627 = vmatpush1.msra.mxu0 %v509
    %628 = vmatprep.subr.mxu0 0.0
    %629 = vmatpush1.msra.mxu0 %v512
    %630 = vmatprep.subr.mxu0 0.0
    %631 = vmatpush1.msra.mxu0 %v515
    %632 = vmatprep.subr.mxu0 0.0
    %633 = vmatpush1.msra.mxu0 %v518
    %634 = vmatprep.subr.mxu0 0.0
    %635 = vmatpush1.msra.mxu0 %v521
    %636 = vmatprep.subr.mxu0 0.0
    %637 = vmatpush1.msra.mxu0 %v524
    %638 = vmatprep.subr.mxu0 0.0
    %639 = vmatpush1.msra.mxu0 %v527
    %640 = vmatprep.subr.mxu0 0.0
    %641 = vmatpush1.msra.mxu0 %v530
    %642 = vmatprep.subr.mxu0 0.0
    %643 = vmatpush1.msra.mxu0 %v533
    %644 = vmatprep.subr.mxu0 0.0
    %645 = vmatpush1.msra.mxu0 %v536
    %646 = vmatprep.subr.mxu0 0.0
    %647 = vmatpush1.msra.mxu0 0.0
    %648 = vmatprep.subr.mxu0 0.0
    %649 = vmatpush1.msra.mxu0 0.0
    %650 = vmatprep.subr.mxu0 0.0
    %651 = vmatpush1.msra.mxu0 0.0
    %652 = vmatprep.subr.mxu0 0.0
    %653 = vmatpush1.msra.mxu0 0.0
    %654 = vmatprep.subr.mxu0 0.0
    %655 = vmatpush1.msra.mxu0 0.0
    %656 = vmatprep.subr.mxu0 0.0
    %657 = vmatpush1.msra.mxu0 0.0
    %658 = vmatprep.subr.mxu0 0.0
    %659 = vmatpush1.msra.mxu0 0.0
    %660 = vmatprep.subr.mxu0 0.0
    %661 = vmatpush1.msra.mxu0 0.0
    %662 = vmatprep.subr.mxu0 0.0
    %663 = vmatpush1.msra.mxu0 0.0
    %664 = vmatprep.subr.mxu0 0.0
    %665 = vmatpush1.msra.mxu0 0.0
    %666 = vmatprep.subr.mxu0 0.0
    %667 = vmatpush1.msra.mxu0 0.0
    %668 = vmatprep.subr.mxu0 0.0
    %669 = vmatpush1.msra.mxu0 0.0
    %670 = vmatprep.subr.mxu0 0.0
    %671 = vmatpush1.msra.mxu0 0.0
    %672 = vmatprep.subr.mxu0 0.0
    %673 = vmatpush1.msra.mxu0 0.0
    %674 = vmatprep.subr.mxu0 0.0
    %675 = vmatpush1.msra.mxu0 0.0
    %676 = vmatprep.subr.mxu0 0.0
    %677 = vmatpush1.msra.mxu0 0.0
    %678 = vmatprep.mubr.f32.mxu0 0.0
    %679 = vmatmul.mubr.f32.gmra.mrb[0].mxu0 %v487
    %v680 = vpop.f32.mrb[0].mxu0
    %v681 = vadd.f32 0.0, %v680
    %v682 = vpop.f32.mrb[0].mxu0
    %683 = vmatprep.mubr.f32.mxu0 0.0
    %684 = vmatmul.mubr.f32.gmra.mrb[0].mxu0 %v488
    %v685 = vpop.f32.mrb[0].mxu0
    %v686 = vadd.f32 0.0, %v685
    %v687 = vpop.f32.mrb[0].mxu0
    %688 = vdwg.mxu0
    %689 = vmatprep.subr.mxu0 0.0
    %690 = vmatpush1.xpose.msra.mxu0 %v606
    %691 = vmatprep.subr.mxu0 0.0
    %692 = vmatpush1.xpose.msra.mxu0 %v612
    %693 = vmatprep.subr.mxu0 0.0
    %694 = vmatpush1.xpose.msra.mxu0 0.0
    %695 = vmatprep.subr.mxu0 0.0
    %696 = vmatpush1.xpose.msra.mxu0 0.0
    %697 = vmatprep.subr.mxu0 0.0
    %698 = vmatpush1.xpose.msra.mxu0 0.0
    %699 = vmatprep.subr.mxu0 0.0
    %700 = vmatpush1.xpose.msra.mxu0 0.0
    %701 = vmatprep.subr.mxu0 0.0
    %702 = vmatpush1.xpose.msra.mxu0 0.0
    %703 = vmatprep.subr.mxu0 0.0
    %704 = vmatpush1.xpose.msra.mxu0 0.0
    %705 = vmatprep.subr.mxu0 0.0
    %706 = vmatpush1.xpose.msra.mxu0 0.0
    %707 = vmatprep.subr.mxu0 0.0
    %708 = vmatpush1.xpose.msra.mxu0 0.0
    %709 = vmatprep.subr.mxu0 0.0
    %710 = vmatpush1.xpose.msra.mxu0 0.0
    %711 = vmatprep.subr.mxu0 0.0
    %712 = vmatpush1.xpose.msra.mxu0 0.0
    %713 = vmatprep.subr.mxu0 0.0
    %714 = vmatpush1.xpose.msra.mxu0 0.0
    %715 = vmatprep.subr.mxu0 0.0
    %716 = vmatpush1.xpose.msra.mxu0 0.0
    %717 = vmatprep.subr.mxu0 0.0
    %718 = vmatpush1.xpose.msra.mxu0 0.0
    %719 = vmatprep.subr.mxu0 0.0
    %720 = vmatpush1.xpose.msra.mxu0 0.0
    %721 = vmatprep.subr.mxu0 0.0
    %722 = vmatpush1.xpose.msra.mxu0 0.0
    %723 = vmatprep.subr.mxu0 0.0
    %724 = vmatpush1.xpose.msra.mxu0 0.0
    %725 = vmatprep.subr.mxu0 0.0
    %726 = vmatpush1.xpose.msra.mxu0 0.0
    %727 = vmatprep.subr.mxu0 0.0
    %728 = vmatpush1.xpose.msra.mxu0 0.0
    %729 = vmatprep.subr.mxu0 0.0
    %730 = vmatpush1.xpose.msra.mxu0 0.0
    %731 = vmatprep.subr.mxu0 0.0
    %732 = vmatpush1.xpose.msra.mxu0 0.0
    %733 = vmatprep.subr.mxu0 0.0
    %734 = vmatpush1.xpose.msra.mxu0 0.0
    %735 = vmatprep.subr.mxu0 0.0
    %736 = vmatpush1.xpose.msra.mxu0 0.0
    %737 = vmatprep.subr.mxu0 0.0
    %738 = vmatpush1.xpose.msra.mxu0 0.0
    %739 = vmatprep.subr.mxu0 0.0
    %740 = vmatpush1.xpose.msra.mxu0 0.0
    %741 = vmatprep.subr.mxu0 0.0
    %742 = vmatpush1.xpose.msra.mxu0 0.0
    %743 = vmatprep.subr.mxu0 0.0
    %744 = vmatpush1.xpose.msra.mxu0 0.0
    %745 = vmatprep.subr.mxu0 0.0
    %746 = vmatpush1.xpose.msra.mxu0 0.0
    %747 = vmatprep.subr.mxu0 0.0
    %748 = vmatpush1.xpose.msra.mxu0 0.0
    %749 = vmatprep.subr.mxu0 0.0
    %750 = vmatpush1.xpose.msra.mxu0 0.0
    %751 = vmatprep.subr.mxu0 0.0
    %752 = vmatpush1.xpose.msra.mxu0 0.0
    %753 = vmatprep.mubr.f32.mxu0 0.0
    %754 = vmatmul.mubr.f32.gmra.mrb[0].mxu0 %v604
    %v755 = vpop.f32.mrb[0].mxu0
    %v756 = vadd.f32 0.0, %v755
    %v757 = vpop.f32.mrb[0].mxu0
    %758 = vmatprep.mubr.f32.mxu0 0.0
    %759 = vmatmul.mubr.f32.gmra.mrb[0].mxu0 %v610
    %v760 = vpop.f32.mrb[0].mxu0
    %v761 = vadd.f32 0.0, %v760
    %v762 = vpop.f32.mrb[0].mxu0
    %763 = vdwg.mxu0
    %v764 = vmul.f32 %v756, 0.088388346
    %v765 = vmul.f32 %v761, 0.088388346
    %vm766 = vcmask 130048
    %v767 = vsel %vm766, %v764, -inf
    %768 = vmax.xlane.f32.xlu0 %v767
    %v769 = vpop.xlane.xlu0 %768
    %v770 = vsel %vm766, %v765, -inf
    %771 = vmax.xlane.f32.xlu0 %v770
    %v772 = vpop.xlane.xlu0 %771
    %v773 = vsub.f32 %v764, %v769
    %v774 = vsub.f32 %v765, %v772
    %v775 = vmul.f32 %v773, 1.442695
    %v776 = vpow.pop %v775
    %v777 = vmul.f32 %v774, 1.442695
    %v778 = vpow.pop %v777
    %v779 = vsel %vm766, %v776, 0.0
    %780 = vadd.xlane.f32.xlu0 %v779
    %v781 = vpop.xlane.xlu0 %780
    %v782 = vsel %vm766, %v778, 0.0
    %783 = vadd.xlane.f32.xlu0 %v782
    %v784 = vpop.xlane.xlu0 %783
    %v785 = vrcp.pop %v781
    %v786 = vrcp.pop %v784
    %v787 = vmul.f32 %v776, %v785
    %v788 = vmul.f32 %v778, %v786
    %v790 = vsel %vm766, %v787, 0
    %v793 = vsel %vm766, %v788, 0
    %795 = vmatprep.subr.mxu0 0.0
    %796 = vmatpush1.msra.mxu0 %v681
    %797 = vmatprep.subr.mxu0 0.0
    %798 = vmatpush1.msra.mxu0 %v686
    %799 = vmatprep.subr.mxu0 0.0
    %800 = vmatpush1.msra.mxu0 0.0
    %801 = vmatprep.subr.mxu0 0.0
    %802 = vmatpush1.msra.mxu0 0.0
    %803 = vmatprep.subr.mxu0 0.0
    %804 = vmatpush1.msra.mxu0 0.0
    %805 = vmatprep.subr.mxu0 0.0
    %806 = vmatpush1.msra.mxu0 0.0
    %807 = vmatprep.subr.mxu0 0.0
    %808 = vmatpush1.msra.mxu0 0.0
    %809 = vmatprep.subr.mxu0 0.0
    %810 = vmatpush1.msra.mxu0 0.0
    %811 = vmatprep.subr.mxu0 0.0
    %812 = vmatpush1.msra.mxu0 0.0
    %813 = vmatprep.subr.mxu0 0.0
    %814 = vmatpush1.msra.mxu0 0.0
    %815 = vmatprep.subr.mxu0 0.0
    %816 = vmatpush1.msra.mxu0 0.0
    %817 = vmatprep.subr.mxu0 0.0
    %818 = vmatpush1.msra.mxu0 0.0
    %819 = vmatprep.subr.mxu0 0.0
    %820 = vmatpush1.msra.mxu0 0.0
    %821 = vmatprep.subr.mxu0 0.0
    %822 = vmatpush1.msra.mxu0 0.0
    %823 = vmatprep.subr.mxu0 0.0
    %824 = vmatpush1.msra.mxu0 0.0
    %825 = vmatprep.subr.mxu0 0.0
    %826 = vmatpush1.msra.mxu0 0.0
    %827 = vmatprep.subr.mxu0 0.0
    %828 = vmatpush1.msra.mxu0 0.0
    %829 = vmatprep.subr.mxu0 0.0
    %830 = vmatpush1.msra.mxu0 0.0
    %831 = vmatprep.subr.mxu0 0.0
    %832 = vmatpush1.msra.mxu0 0.0
    %833 = vmatprep.subr.mxu0 0.0
    %834 = vmatpush1.msra.mxu0 0.0
    %835 = vmatprep.subr.mxu0 0.0
    %836 = vmatpush1.msra.mxu0 0.0
    %837 = vmatprep.subr.mxu0 0.0
    %838 = vmatpush1.msra.mxu0 0.0
    %839 = vmatprep.subr.mxu0 0.0
    %840 = vmatpush1.msra.mxu0 0.0
    %841 = vmatprep.subr.mxu0 0.0
    %842 = vmatpush1.msra.mxu0 0.0
    %843 = vmatprep.subr.mxu0 0.0
    %844 = vmatpush1.msra.mxu0 0.0
    %845 = vmatprep.subr.mxu0 0.0
    %846 = vmatpush1.msra.mxu0 0.0
    %847 = vmatprep.subr.mxu0 0.0
    %848 = vmatpush1.msra.mxu0 0.0
    %849 = vmatprep.subr.mxu0 0.0
    %850 = vmatpush1.msra.mxu0 0.0
    %851 = vmatprep.subr.mxu0 0.0
    %852 = vmatpush1.msra.mxu0 0.0
    %853 = vmatprep.subr.mxu0 0.0
    %854 = vmatpush1.msra.mxu0 0.0
    %855 = vmatprep.subr.mxu0 0.0
    %856 = vmatpush1.msra.mxu0 0.0
    %857 = vmatprep.subr.mxu0 0.0
    %858 = vmatpush1.msra.mxu0 0.0
    %859 = vmatprep.mubr.f32.mxu0 0.0
    %860 = vmatmul.mubr.f32.gmra.mrb[0].mxu0 %v790
    %v861 = vpop.f32.mrb[0].mxu0
    %v862 = vadd.f32 0.0, %v861
    %v863 = vpop.f32.mrb[0].mxu0
    %864 = vmatprep.mubr.f32.mxu0 0.0
    %865 = vmatmul.mubr.f32.gmra.mrb[0].mxu0 %v793
    %v866 = vpop.f32.mrb[0].mxu0
    %v867 = vadd.f32 0.0, %v866
    %v868 = vpop.f32.mrb[0].mxu0
    %869 = vdwg.mxu0
    %v870 = vadd.f32 %v487, %v862
    %v871 = vadd.f32 %v488, %v867
    %v872 = vld [vmem:[%s4] sm:$0xff]
    %v873 = vld [vmem:[%s4 + $0x8] sm:$0xff]
    %v874 = vld [vmem:[%s4 + $0x10] sm:$0xff]
    %v875 = vld [vmem:[%s4 + $0x18] sm:$0xff]
    %v876 = vld [vmem:[%s4 + $0x20] sm:$0xff]
    %v877 = vld [vmem:[%s4 + $0x28] sm:$0xff]
    %v878 = vld [vmem:[%s4 + $0x30] sm:$0xff]
    %v879 = vld [vmem:[%s4 + $0x38] sm:$0xff]
    %v880 = vld [vmem:[%s4 + $0x40] sm:$0xff]
    %v881 = vld [vmem:[%s4 + $0x48] sm:$0xff]
    %v882 = vld [vmem:[%s4 + $0x50] sm:$0xff]
    %v883 = vld [vmem:[%s4 + $0x58] sm:$0xff]
    %v884 = vld [vmem:[%s4 + $0x60] sm:$0xff]
    %v885 = vld [vmem:[%s4 + $0x68] sm:$0xff]
    %v886 = vld [vmem:[%s4 + $0x70] sm:$0xff]
    %v887 = vld [vmem:[%s4 + $0x78] sm:$0xff]
    %v888 = vld [vmem:[%s5] sm:$0x1]
    %v890 = vlaneseq
    %v891 = vshrl.u32 %v890, 7
    %v892 = vsub.s32 0, %v891
    %v893 = vrot.slane %v888, %v892
    %895 = vmatprep.subr.mxu0 0.0
    %896 = vmatpush1.msra.mxu0 %v872
    %897 = vmatprep.subr.mxu0 0.0
    %898 = vmatpush1.msra.mxu0 %v873
    %899 = vmatprep.subr.mxu0 0.0
    %900 = vmatpush1.msra.mxu0 %v874
    %901 = vmatprep.subr.mxu0 0.0
    %902 = vmatpush1.msra.mxu0 %v875
    %903 = vmatprep.subr.mxu0 0.0
    %904 = vmatpush1.msra.mxu0 %v876
    %905 = vmatprep.subr.mxu0 0.0
    %906 = vmatpush1.msra.mxu0 %v877
    %907 = vmatprep.subr.mxu0 0.0
    %908 = vmatpush1.msra.mxu0 %v878
    %909 = vmatprep.subr.mxu0 0.0
    %910 = vmatpush1.msra.mxu0 %v879
    %911 = vmatprep.subr.mxu0 0.0
    %912 = vmatpush1.msra.mxu0 %v880
    %913 = vmatprep.subr.mxu0 0.0
    %914 = vmatpush1.msra.mxu0 %v881
    %915 = vmatprep.subr.mxu0 0.0
    %916 = vmatpush1.msra.mxu0 %v882
    %917 = vmatprep.subr.mxu0 0.0
    %918 = vmatpush1.msra.mxu0 %v883
    %919 = vmatprep.subr.mxu0 0.0
    %920 = vmatpush1.msra.mxu0 %v884
    %921 = vmatprep.subr.mxu0 0.0
    %922 = vmatpush1.msra.mxu0 %v885
    %923 = vmatprep.subr.mxu0 0.0
    %924 = vmatpush1.msra.mxu0 %v886
    %925 = vmatprep.subr.mxu0 0.0
    %926 = vmatpush1.msra.mxu0 %v887
    %927 = vmatprep.subr.mxu0 0.0
    %928 = vmatpush1.msra.mxu0 0.0
    %929 = vmatprep.subr.mxu0 0.0
    %930 = vmatpush1.msra.mxu0 0.0
    %931 = vmatprep.subr.mxu0 0.0
    %932 = vmatpush1.msra.mxu0 0.0
    %933 = vmatprep.subr.mxu0 0.0
    %934 = vmatpush1.msra.mxu0 0.0
    %935 = vmatprep.subr.mxu0 0.0
    %936 = vmatpush1.msra.mxu0 0.0
    %937 = vmatprep.subr.mxu0 0.0
    %938 = vmatpush1.msra.mxu0 0.0
    %939 = vmatprep.subr.mxu0 0.0
    %940 = vmatpush1.msra.mxu0 0.0
    %941 = vmatprep.subr.mxu0 0.0
    %942 = vmatpush1.msra.mxu0 0.0
    %943 = vmatprep.subr.mxu0 0.0
    %944 = vmatpush1.msra.mxu0 0.0
    %945 = vmatprep.subr.mxu0 0.0
    %946 = vmatpush1.msra.mxu0 0.0
    %947 = vmatprep.subr.mxu0 0.0
    %948 = vmatpush1.msra.mxu0 0.0
    %949 = vmatprep.subr.mxu0 0.0
    %950 = vmatpush1.msra.mxu0 0.0
    %951 = vmatprep.subr.mxu0 0.0
    %952 = vmatpush1.msra.mxu0 0.0
    %953 = vmatprep.subr.mxu0 0.0
    %954 = vmatpush1.msra.mxu0 0.0
    %955 = vmatprep.subr.mxu0 0.0
    %956 = vmatpush1.msra.mxu0 0.0
    %957 = vmatprep.subr.mxu0 0.0
    %958 = vmatpush1.msra.mxu0 0.0
    %959 = vmatprep.mubr.f32.mxu0 0.0
    %960 = vmatmul.mubr.f32.gmra.mrb[0].mxu0 %v870
    %v961 = vpop.f32.mrb[0].mxu0
    %v962 = vadd.f32 %v893, %v961
    %v963 = vpop.f32.mrb[0].mxu0
    %964 = vmatprep.mubr.f32.mxu0 0.0
    %965 = vmatmul.mubr.f32.gmra.mrb[0].mxu0 %v871
    %v966 = vpop.f32.mrb[0].mxu0
    %v967 = vadd.f32 %v893, %v966
    %v968 = vpop.f32.mrb[0].mxu0
    %969 = vdwg.mxu0
    %v970 = vmax.f32 %v962, 0.0
    %v971 = vmax.f32 %v967, 0.0
    %972 = vst [vmem:[#allocation2] sm:$0xff] %v970
    %973 = vst [vmem:[#allocation2 + $0x8] sm:$0xff] %v971
    %v974 = vld [vmem:[%s6] sm:$0xff]
    %v975 = vld [vmem:[%s6 + $0x8] sm:$0xff]
    %v976 = vld [vmem:[%s6 + $0x10] sm:$0xff]
    %v977 = vld [vmem:[%s6 + $0x18] sm:$0xff]
    %v978 = vld [vmem:[%s6 + $0x20] sm:$0xff]
    %v979 = vld [vmem:[%s6 + $0x28] sm:$0xff]
    %v980 = vld [vmem:[%s6 + $0x30] sm:$0xff]
    %v981 = vld [vmem:[%s6 + $0x38] sm:$0xff]
    %v982 = vld [vmem:[%s6 + $0x40] sm:$0xff]
    %v983 = vld [vmem:[%s6 + $0x48] sm:$0xff]
    %v984 = vld [vmem:[%s6 + $0x50] sm:$0xff]
    %v985 = vld [vmem:[%s6 + $0x58] sm:$0xff]
    %v986 = vld [vmem:[%s6 + $0x60] sm:$0xff]
    %v987 = vld [vmem:[%s6 + $0x68] sm:$0xff]
    %v988 = vld [vmem:[%s6 + $0x70] sm:$0xff]
    %v989 = vld [vmem:[%s6 + $0x78] sm:$0xff]
    %v990 = vld [vmem:[%s6 + $0x80] sm:$0xff]
    %v991 = vld [vmem:[%s6 + $0x88] sm:$0xff]
    %v992 = vld [vmem:[%s6 + $0x90] sm:$0xff]
    %v993 = vld [vmem:[%s6 + $0x98] sm:$0xff]
    %v994 = vld [vmem:[%s6 + $0xa0] sm:$0xff]
    %v995 = vld [vmem:[%s6 + $0xa8] sm:$0xff]
    %v996 = vld [vmem:[%s6 + $0xb0] sm:$0xff]
    %v997 = vld [vmem:[%s6 + $0xb8] sm:$0xff]
    %v998 = vld [vmem:[%s6 + $0xc0] sm:$0xff]
    %v999 = vld [vmem:[%s6 + $0xc8] sm:$0xff]
    %v1000 = vld [vmem:[%s6 + $0xd0] sm:$0xff]
    %v1001 = vld [vmem:[%s6 + $0xd8] sm:$0xff]
    %v1002 = vld [vmem:[%s6 + $0xe0] sm:$0xff]
    %v1003 = vld [vmem:[%s6 + $0xe8] sm:$0xff]
    %v1004 = vld [vmem:[%s6 + $0xf0] sm:$0xff]
    %v1005 = vld [vmem:[%s6 + $0xf8] sm:$0xff]
    %v1006 = vld [vmem:[%s7] sm:$0x3]
    %v1008 = vlaneseq
    %v1009 = vshrl.u32 %v1008, 7
    %v1010 = vsub.s32 0, %v1009
    %v1011 = vrot.slane %v1006, %v1010
    %v1012 = vlaneseq
    %v1013 = vshrl.u32 %v1012, 7
    %v1014 = vsub.s32 1, %v1013
    %v1015 = vrot.slane %v1006, %v1014
    %1018 = vmatprep.subr.mxu0 %v975
    %1019 = vmatpush1.msra.mxu0 %v974
    %1020 = vmatprep.subr.mxu0 %v977
    %1021 = vmatpush1.msra.mxu0 %v976
    %1022 = vmatprep.subr.mxu0 %v979
    %1023 = vmatpush1.msra.mxu0 %v978
    %1024 = vmatprep.subr.mxu0 %v981
    %1025 = vmatpush1.msra.mxu0 %v980
    %1026 = vmatprep.subr.mxu0 %v983
    %1027 = vmatpush1.msra.mxu0 %v982
    %1028 = vmatprep.subr.mxu0 %v985
    %1029 = vmatpush1.msra.mxu0 %v984
    %1030 = vmatprep.subr.mxu0 %v987
    %1031 = vmatpush1.msra.mxu0 %v986
    %1032 = vmatprep.subr.mxu0 %v989
    %1033 = vmatpush1.msra.mxu0 %v988
    %1034 = vmatprep.subr.mxu0 %v991
    %1035 = vmatpush1.msra.mxu0 %v990
    %1036 = vmatprep.subr.mxu0 %v993
    %1037 = vmatpush1.msra.mxu0 %v992
    %1038 = vmatprep.subr.mxu0 %v995
    %1039 = vmatpush1.msra.mxu0 %v994
    %1040 = vmatprep.subr.mxu0 %v997
    %1041 = vmatpush1.msra.mxu0 %v996
    %1042 = vmatprep.subr.mxu0 %v999
    %1043 = vmatpush1.msra.mxu0 %v998
    %1044 = vmatprep.subr.mxu0 %v1001
    %1045 = vmatpush1.msra.mxu0 %v1000
    %1046 = vmatprep.subr.mxu0 %v1003
    %1047 = vmatpush1.msra.mxu0 %v1002
    %1048 = vmatprep.subr.mxu0 %v1005
    %1049 = vmatpush1.msra.mxu0 %v1004
    %1050 = vmatprep.subr.mxu0 0.0
    %1051 = vmatpush1.msra.mxu0 0.0
    %1052 = vmatprep.subr.mxu0 0.0
    %1053 = vmatpush1.msra.mxu0 0.0
    %1054 = vmatprep.subr.mxu0 0.0
    %1055 = vmatpush1.msra.mxu0 0.0
    %1056 = vmatprep.subr.mxu0 0.0
    %1057 = vmatpush1.msra.mxu0 0.0
    %1058 = vmatprep.subr.mxu0 0.0
    %1059 = vmatpush1.msra.mxu0 0.0
    %1060 = vmatprep.subr.mxu0 0.0
    %1061 = vmatpush1.msra.mxu0 0.0
    %1062 = vmatprep.subr.mxu0 0.0
    %1063 = vmatpush1.msra.mxu0 0.0
    %1064 = vmatprep.subr.mxu0 0.0
    %1065 = vmatpush1.msra.mxu0 0.0
    %1066 = vmatprep.subr.mxu0 0.0
    %1067 = vmatpush1.msra.mxu0 0.0
    %1068 = vmatprep.subr.mxu0 0.0
    %1069 = vmatpush1.msra.mxu0 0.0
    %1070 = vmatprep.subr.mxu0 0.0
    %1071 = vmatpush1.msra.mxu0 0.0
    %1072 = vmatprep.subr.mxu0 0.0
    %1073 = vmatpush1.msra.mxu0 0.0
    %1074 = vmatprep.subr.mxu0 0.0
    %1075 = vmatpush1.msra.mxu0 0.0
    %1076 = vmatprep.subr.mxu0 0.0
    %1077 = vmatpush1.msra.mxu0 0.0
    %1078 = vmatprep.subr.mxu0 0.0
    %1079 = vmatpush1.msra.mxu0 0.0
    %1080 = vmatprep.subr.mxu0 0.0
    %1081 = vmatpush1.msra.mxu0 0.0
    %1082 = vmatprep.mubr.f32.mxu0 0.0
    %1083 = vmatmul.mubr.f32.gmra.mrb[0].mxu0 %v970
    %v1084 = vpop.f32.mrb[0].mxu0
    %v1085 = vadd.f32 %v1011, %v1084
    %v1086 = vpop.f32.mrb[0].mxu0
    %v1087 = vadd.f32 %v1015, %v1086
    %1088 = vmatprep.mubr.f32.mxu0 0.0
    %1089 = vmatmul.mubr.f32.gmra.mrb[0].mxu0 %v971
    %v1090 = vpop.f32.mrb[0].mxu0
    %v1091 = vadd.f32 %v1011, %v1090
    %v1092 = vpop.f32.mrb[0].mxu0
    %v1093 = vadd.f32 %v1015, %v1092
    %1094 = vdwg.mxu0
    %v1095 = vld [vmem:[%s8] sm:$0x3]
    %vm1096 = vcmp.gt.f32.partialorder %v1095, 0.5
    %v1097 = vsel %vm1096, 1, 0
    %v1098 = vlaneseq
    %v1099 = vshrl.u32 %v1098, 7
    %v1100 = vsub.s32 0, %v1099
    %v1101 = vrot.slane %v1097, %v1100
    %v1102 = vlaneseq
    %v1103 = vshrl.u32 %v1102, 7
    %v1104 = vsub.s32 1, %v1103
    %v1105 = vrot.slane %v1097, %v1104
    %vm1106 = vcmp.eq.s32.totalorder %v1101, 1
    %vm1107 = vcmp.eq.s32.totalorder %v1105, 1
    %v1108 = vsel %vm1106, -99.0, %v1085
    %v1109 = vsel %vm1107, -99.0, %v1087
    %v1110 = vsel %vm1106, -99.0, %v1091
    %v1111 = vsel %vm1107, -99.0, %v1093
    %1112 = vst [vmem:[%s10] sm:$0xff] %v1108
    %1113 = vst [vmem:[%s10 + $0x8] sm:$0xff] %v1109
    %1114 = vst [vmem:[%s10 + $0x10] sm:$0xff] %v1110
    %1115 = vst [vmem:[%s10 + $0x18] sm:$0xff] %v1111
    %v1116 = vlaneseq
    %v1117 = vand.u32 %v1116, 127
    %v1118 = vadd.s32 %v1117, 128
    %vm1119 = vcmp.lt.s32.totalorder %v1117, 31
    %vm1120 = vcmp.lt.s32.totalorder %v1118, 31
    %v1121 = vsel %vm1119, %v1108, -inf
    %v1122 = vsel %vm1120, %v1109, -inf
    %v1123 = vsel %vm1119, %v1110, -inf
    %v1124 = vsel %vm1120, %v1111, -inf
    %v1125 = vmax.f32 %v1121, %v1122
    %1126 = vmax.xlane.f32.xlu0 %v1125
    %v1127 = vpop.xlane.xlu0 %1126
    %v1128 = vmax.f32 %v1123, %v1124
    %1129 = vmax.xlane.f32.xlu0 %v1128
    %v1130 = vpop.xlane.xlu0 %1129
    %v1131 = vsub.f32 %v1121, %v1127
    %v1132 = vsub.f32 %v1122, %v1127
    %v1133 = vsub.f32 %v1123, %v1130
    %v1134 = vsub.f32 %v1124, %v1130
    %v1135 = vmul.f32 %v1131, 1.442695
    %v1136 = vpow.pop %v1135
    %v1137 = vmul.f32 %v1132, 1.442695
    %v1138 = vpow.pop %v1137
    %v1139 = vmul.f32 %v1133, 1.442695
    %v1140 = vpow.pop %v1139
    %v1141 = vmul.f32 %v1134, 1.442695
    %v1142 = vpow.pop %v1141
    %v1143 = vadd.f32 %v1136, %v1138
    %1144 = vadd.xlane.f32.xlu0 %v1143
    %v1145 = vpop.xlane.xlu0 %1144
    %v1146 = vadd.f32 %v1140, %v1142
    %1147 = vadd.xlane.f32.xlu0 %v1146
    %v1148 = vpop.xlane.xlu0 %1147
    %v1149 = vrcp.pop %v1145
    %v1150 = vrcp.pop %v1148
    %v1151 = vmul.f32 %v1136, %v1149
    %v1152 = vmul.f32 %v1138, %v1149
    %v1153 = vmul.f32 %v1140, %v1150
    %v1154 = vmul.f32 %v1142, %v1150
    %1155 = vst [vmem:[%s11] sm:$0xff] %v1151
    %1156 = vst [vmem:[%s11 + $0x8] sm:$0xff] %v1152
    %1157 = vst [vmem:[%s11 + $0x10] sm:$0xff] %v1153
    %1158 = vst [vmem:[%s11 + $0x18] sm:$0xff] %v1154
    // Predicated region
    $region38: #{roi_attention_box_head_forward.1} parent=1 // pred_check
      _
    $region39: #{roi_attention_box_head_forward.1} parent=1 // pred_check_branch
      %1160 = sbr.rel (0) target = $region41
    $region40: #{roi_attention_box_head_forward.1} parent=1 // pred_region
      %s1162 = ssub.s32 256, 256
      %1163 = vsyncadd [#allocation3], %s1162
      %s1164 = sshll.u32 [#allocation2], 4
      %s1165 = int_to_ptr.vmem [resolvable:$true] %s1164
      %1170 = dma.vmem_to_hbm [thread:$0]  %s1165, 256, %s9, [#allocation3], 128, 128, 8
    $region41: #{roi_attention_box_head_forward.1} parent=1 // pred_fallthru
      _
    // Predicated region
    $region42: #{roi_attention_box_head_forward.1} parent=1 // pred_check
      _
    $region43: #{roi_attention_box_head_forward.1} parent=1 // pred_check_branch
      %1172 = sbr.rel (0) target = $region45
    $region44: #{roi_attention_box_head_forward.1} parent=1 // pred_region
      _
    $region45: #{roi_attention_box_head_forward.1} parent=1 // pred_fallthru
      _
    // Predicated region
    $region46: #{roi_attention_box_head_forward.1} parent=1 // pred_check
      _
    $region47: #{roi_attention_box_head_forward.1} parent=1 // pred_check_branch
      %1174 = sbr.rel (0) target = $region49
    $region48: #{roi_attention_box_head_forward.1} parent=1 // pred_region
      _
    $region49: #{roi_attention_box_head_forward.1} parent=1 // pred_fallthru
      _
    // Predicated region
    $region50: #{roi_attention_box_head_forward.1} parent=1 // pred_check
      _
    $region51: #{roi_attention_box_head_forward.1} parent=1 // pred_check_branch
      %1176 = sbr.rel (0) target = $region53
    $region52: #{roi_attention_box_head_forward.1} parent=1 // pred_region
      %1177 = dma.done [#allocation3], 256
    $region53: #{roi_attention_box_head_forward.1} parent=1 // pred_fallthru
      _
    // Predicated region
    $region54: #{roi_attention_box_head_forward.1} parent=1 // pred_check
      _
    $region55: #{roi_attention_box_head_forward.1} parent=1 // pred_check_branch
      %1179 = sbr.rel (0) target = $region57
    $region56: #{roi_attention_box_head_forward.1} parent=1 // pred_region
      _
    $region57: #{roi_attention_box_head_forward.1} parent=1 // pred_fallthru
      _
    // Predicated region
    $region58: #{roi_attention_box_head_forward.1} parent=1 // pred_check
      _
    $region59: #{roi_attention_box_head_forward.1} parent=1 // pred_check_branch
      %1181 = sbr.rel (0) target = $region61
    $region60: #{roi_attention_box_head_forward.1} parent=1 // pred_region
      _
    $region61: #{roi_attention_box_head_forward.1} parent=1 // pred_fallthru
      _
    %1182 = vsyncpa [#allocation3], 1

</llo_original>
